<compile_context>
chip_gen: v7x
topology: tpu7x:2x2x1
jax: 0.10.0
libtpu: 0.0.40
codegen_flags: <defaults>
</compile_context>

<pallas_src>
import jax
import jax.numpy as jnp
from jax.experimental import pallas as pl
from jax.experimental.pallas import tpu as pltpu


def _round_up(a, m):
    return (a + m - 1) // m * m


def reconstruction_kernel(x_ref, w1_ref, b1_ref, w2_ref, b2_ref, out_ref, h_ref):
    # Grid = (batch tiles, feat tiles); feat axis is innermost ("arbitrary").
    # fc1 only depends on the batch tile, so compute it once per batch tile
    # (first feat step), stage ReLU(fc1) in VMEM scratch, reuse for every
    # feat tile of fc2.
    @pl.when(pl.program_id(1) == 0)
    def _():
        h = jnp.dot(x_ref[...], w1_ref[...], preferred_element_type=jnp.float32)
        h = h + b1_ref[...]                       # (tm, hid) + (1, hid), f32
        h_ref[...] = jnp.maximum(h, 0.0).astype(h_ref.dtype)

    o = jnp.dot(h_ref[...], w2_ref[...], preferred_element_type=jnp.float32)
    o = o + b2_ref[...]                           # (tm, tn) + (1, tn), f32
    out_ref[...] = jnp.maximum(o, 0.0).astype(out_ref.dtype)


def prepare_params(w1, b1, w2, b2, content_dim, style_dim, *, compute_dtype=None):
    """Pad / cast the Linear parameters ONCE (hoisted out of the per-call path).

    Weights use the (in_features, out_features) layout, i.e. the transpose of
    torch.nn.Linear.weight, so the kernel computes x @ W + b directly.
    Padding with zeros is numerically exact (padded rows/cols contribute 0 and
    padded outputs are sliced off)."""
    in_dim, hidden = w1.shape
    hidden2, feat_dim = w2.shape
    assert in_dim == content_dim + style_dim, "W1 rows must equal cd + sd"
    assert hidden2 == hidden, "W2 rows must equal fc1 out_features"

    k_pad = _round_up(in_dim, 128)
    hidden_pad = _round_up(hidden, 128)
    feat_pad = _round_up(feat_dim, 128)

    w_dtype = compute_dtype if compute_dtype is not None else w1.dtype

    w1p = jnp.pad(w1, ((0, k_pad - in_dim), (0, hidden_pad - hidden))).astype(w_dtype)
    w2p = jnp.pad(w2, ((0, hidden_pad - hidden), (0, feat_pad - feat_dim))).astype(w_dtype)
    # Biases stay f32: they are added onto the f32 MXU accumulators.
    b1p = jnp.pad(b1.astype(jnp.float32), ((0, hidden_pad - hidden),)).reshape(1, hidden_pad)
    b2p = jnp.pad(b2.astype(jnp.float32), ((0, feat_pad - feat_dim),)).reshape(1, feat_pad)

    return dict(
        w1=w1p, b1=b1p, w2=w2p, b2=b2p,
        content_dim=content_dim, style_dim=style_dim,
        in_dim=in_dim, hidden=hidden, feat_dim=feat_dim,
        k_pad=k_pad, hidden_pad=hidden_pad, feat_pad=feat_pad,
        compute_dtype=jnp.dtype(w_dtype),
    )


def _tpu_vmem_budget_bytes():
    """Generation-aware VMEM budget: 75% of physical VMEM; conservative fallback."""
    try:
        cap = int(pltpu.get_tpu_info().vmem_capacity_bytes)
    except Exception:
        cap = 64 * 2 ** 20  # v7x per-core VMEM (safe everywhere)
    return (cap * 3) // 4


def _default_tm():
    """v5e's 4x128x128 MXU saturates at 128 rows; v6e/v7x benefit from 256."""
    try:
        kind = jax.devices()[0].device_kind.lower()
    except Exception:
        kind = ""
    return 128 if "v5" in kind else 256


def reconstruction_forward(content, style, params, *, tm=None, tn=None):
    """content: (B, cd); style: (B, sd); params from prepare_params()."""
    B, cd = content.shape
    sd = style.shape[1]
    assert cd == params["content_dim"] and sd == params["style_dim"]

    out_dtype = content.dtype
    k_pad = params["k_pad"]
    hidden_pad = params["hidden_pad"]
    feat_pad = params["feat_pad"]
    feat_dim = params["feat_dim"]
    cdt = params["compute_dtype"]
    h_dtype = jnp.bfloat16 if cdt == jnp.dtype(jnp.bfloat16) else jnp.float32

    # Concat fused in the wrapper; pad K to a lane-dense 128-multiple.
    x = jnp.concatenate([content, style], axis=1)
    if k_pad != cd + sd:
        x = jnp.pad(x, ((0, 0), (0, k_pad - (cd + sd))))
    x = x.astype(cdt)

    # ---- batch tiling: guarantee >= 2 tiles when B > 8 (megacore / overlap).
    if tm is None:
        tm = _default_tm()
    if 8 < B <= tm:
        tm_eff = _round_up((B + 1) // 2, 8)
    else:
        tm_eff = min(tm, _round_up(B, 8))
    B_pad = _round_up(B, tm_eff)
    if B_pad != B:
        x = jnp.pad(x, ((0, B_pad - B), (0, 0)))
    nb = B_pad // tm_eff

    # ---- feat tiling: stream W2 only if fully-resident weights blow the budget.
    budget = _tpu_vmem_budget_bytes()
    x_it = jnp.dtype(cdt).itemsize
    h_it = jnp.dtype(h_dtype).itemsize
    out_it = jnp.dtype(out_dtype).itemsize

    def vmem_estimate(tn_):
        return (2 * tm_eff * k_pad * x_it                       # x tile (2 bufs)
                + 2 * tm_eff * tn_ * out_it                     # out tile (2 bufs)
                + 2 * (k_pad * hidden_pad * x_it + hidden_pad * 4)   # W1 + b1
                + 2 * (hidden_pad * tn_ * x_it + tn_ * 4)       # W2 + b2
                + tm_eff * hidden_pad * h_it)                   # fc1 scratch

    if tn is None:
        tn = feat_pad
        while vmem_estimate(tn) > budget and tn % 256 == 0 and tn > 512:
            tn //= 2
    else:
        tn = max(128, (tn // 128) * 128)
        tn = min(tn, feat_pad)
        while feat_pad % tn != 0:
            tn -= 128
    nf = feat_pad // tn
    grid = (nb, nf)

    def run(single_buffer_weights):
        const_kw = {}
        if single_buffer_weights and hasattr(pl, "Buffered"):
            # Grid-constant blocks are revisited; double-buffering them is pure
            # VMEM waste.
            const_kw = dict(pipeline_mode=pl.Buffered(1))
        # W2/b2 blocks are only grid-constant when the feat axis isn't tiled.
        w2_kw = const_kw if nf == 1 else {}

        in_specs = [
            pl.BlockSpec((tm_eff, k_pad), lambda i, j: (i, 0)),               # x tile
            pl.BlockSpec((k_pad, hidden_pad), lambda i, j: (0, 0), **const_kw),   # W1
            pl.BlockSpec((1, hidden_pad), lambda i, j: (0, 0), **const_kw),       # b1
            pl.BlockSpec((hidden_pad, tn), lambda i, j: (0, j), **w2_kw),         # W2
            pl.BlockSpec((1, tn), lambda i, j: (0, j), **w2_kw),                  # b2
        ]
        out_spec = pl.BlockSpec((tm_eff, tn), lambda i, j: (i, j))

        return pl.pallas_call(
            reconstruction_kernel,
            out_shape=jax.ShapeDtypeStruct((B_pad, feat_pad), out_dtype),
            grid_spec=pltpu.PrefetchScalarGridSpec(
                num_scalar_prefetch=0,
                grid=grid,
                in_specs=in_specs,
                out_specs=out_spec,
                scratch_shapes=[pltpu.VMEM((tm_eff, hidden_pad), h_dtype)],
            ),
            compiler_params=pltpu.CompilerParams(
                dimension_semantics=("parallel", "arbitrary"),
                vmem_limit_bytes=int(budget),
            ),
        )(x, params["w1"], params["b1"], params["w2"], params["b2"])

    try:
        out = run(True)
    except Exception:
        # pipeline_mode=pl.Buffered(1) not supported by this jax version:
        # fall back to default (double) buffering.
        out = run(False)

    if B_pad != B or feat_pad != feat_dim:
        out = out[:B, :feat_dim]
    return out


if __name__ == "__main__":
    key = jax.random.PRNGKey(0)

    def torch_linear_init(k, fan_in, fan_out, dtype=jnp.float32):
        kw, kb = jax.random.split(k)
        lim = 1.0 / jnp.sqrt(fan_in)
        w = jax.random.uniform(kw, (fan_in, fan_out), dtype, -lim, lim)
        b = jax.random.uniform(kb, (fan_out,), dtype, -lim, lim)
        return w, b

    # Small shapes consistent with the module (feat_dim divisible by 4).
    batch, feat_dim, content_dim, style_dim = 32, 512, 31, 100
    hidden = feat_dim // 4
    in_dim = content_dim + style_dim

    kc, ks, k1, k2 = jax.random.split(key, 4)
    content = jax.random.normal(kc, (batch, content_dim), jnp.float32)
    style = jax.random.normal(ks, (batch, style_dim), jnp.float32)
    w1, b1 = torch_linear_init(k1, in_dim, hidden)
    w2, b2 = torch_linear_init(k2, hidden, feat_dim)

    # Pure-JAX reference (concat -> fc1 -> relu -> fc2 -> relu).
    x_ref = jnp.concatenate([content, style], axis=1)
    ref = jnp.maximum(jnp.maximum(x_ref @ w1 + b1, 0.0) @ w2 + b2, 0.0)

    # 1) Exact path: f32 operands, auto tiling (weights fully resident).
    params_f32 = prepare_params(w1, b1, w2, b2, content_dim, style_dim)
    out = jax.block_until_ready(reconstruction_forward(content, style, params_f32))
    assert out.shape == (batch, feat_dim)
    assert jnp.allclose(out, ref, atol=1e-4, rtol=1e-4), "f32 kernel mismatch vs reference"

    # 2) Fast path: bf16 MXU operands, explicit feat tiling (tn=256), odd batch
    #    to exercise the batch-padding / feat-streaming / scratch-reuse paths.
    params_bf16 = prepare_params(w1, b1, w2, b2, content_dim, style_dim,
                                 compute_dtype=jnp.bfloat16)
    bsmall = 13
    out_bf16 = jax.block_until_ready(
        reconstruction_forward(content[:bsmall], style[:bsmall], params_bf16, tn=256))
    assert out_bf16.shape == (bsmall, feat_dim)
    assert jnp.allclose(out_bf16, ref[:bsmall], atol=5e-2, rtol=5e-2), \
        "bf16 kernel mismatch vs reference"

    # TODO(synk): nn.Softmax(dim=1) is constructed in the PyTorch forward() but
    # never applied, so it is intentionally not implemented.
    print("KERNEL_OK")
</pallas_src>

<mosaic_0001>
module attributes {stable_mosaic.version = 11 : i64} {
  func.func @reconstruction_kernel(%arg0: i32, %arg1: i32, %arg2: memref<16x256xf32, #tpu.memory_space<vmem>>, %arg3: memref<256x128xf32, #tpu.memory_space<vmem>>, %arg4: memref<1x128xf32, #tpu.memory_space<vmem>>, %arg5: memref<128x512xf32, #tpu.memory_space<vmem>>, %arg6: memref<1x512xf32, #tpu.memory_space<vmem>>, %arg7: memref<16x512xf32, #tpu.memory_space<vmem>>, %arg8: memref<16x128xf32, #tpu.memory_space<vmem>>) attributes {dimension_semantics = [#tpu.dimension_semantics<parallel>, #tpu.dimension_semantics<arbitrary>], iteration_bounds = array<i64: 2, 1>, scalar_prefetch = 0 : i64, scratch_operands = 1 : i64, tpu.core_type = #tpu.core_type<tc>, window_params = [{transform_indices = @transform_0, window_bounds = array<i64: 16, 256>}, {pipeline_mode = #tpu.pipeline_mode<synchronous>, transform_indices = @transform_1, window_bounds = array<i64: 256, 128>}, {pipeline_mode = #tpu.pipeline_mode<synchronous>, transform_indices = @transform_2, window_bounds = array<i64: 1, 128>}, {pipeline_mode = #tpu.pipeline_mode<synchronous>, transform_indices = @transform_3, window_bounds = array<i64: 128, 512>}, {pipeline_mode = #tpu.pipeline_mode<synchronous>, transform_indices = @transform_4, window_bounds = array<i64: 1, 512>}, {transform_indices = @transform_5, window_bounds = array<i64: 16, 512>}]} {
    %c0_i32 = arith.constant 0 : i32
    %0 = arith.cmpi eq, %arg1, %c0_i32 : i32
    %1 = arith.extui %0 : i1 to i32
    %c0_i32_0 = arith.constant 0 : i32
    %2 = arith.cmpi ne, %1, %c0_i32_0 : i32
    scf.if %2 {
      %c0_9 = arith.constant 0 : index
      %c0_10 = arith.constant 0 : index
      %12 = vector.load %arg2[%c0_9, %c0_10] : memref<16x256xf32, #tpu.memory_space<vmem>>, vector<16x256xf32>
      %c0_11 = arith.constant 0 : index
      %c0_12 = arith.constant 0 : index
      %13 = vector.load %arg3[%c0_11, %c0_12] : memref<256x128xf32, #tpu.memory_space<vmem>>, vector<256x128xf32>
      %cst_13 = arith.constant dense<0.000000e+00> : vector<16x128xf32>
      %14 = tpu.matmul %12, %13, %cst_13 {dimension_numbers = #tpu.dot_dimension_numbers<[1], [0], [0], [1], [0, 0, 1, 1], [], []>} : vector<16x256xf32>, vector<256x128xf32>, vector<16x128xf32> -> vector<16x128xf32>
      %c0_14 = arith.constant 0 : index
      %c0_15 = arith.constant 0 : index
      %15 = vector.load %arg4[%c0_14, %c0_15] : memref<1x128xf32, #tpu.memory_space<vmem>>, vector<1x128xf32>
      %16 = vector.broadcast %15 : vector<1x128xf32> to vector<16x128xf32>
      %17 = arith.addf %14, %16 : vector<16x128xf32>
      %cst_16 = arith.constant 0.000000e+00 : f32
      %18 = vector.broadcast %cst_16 : f32 to vector<16x128xf32>
      %19 = arith.maximumf %17, %18 : vector<16x128xf32>
      %c0_17 = arith.constant 0 : index
      %c0_18 = arith.constant 0 : index
      %20 = vector.load %arg8[%c0_17, %c0_18] : memref<16x128xf32, #tpu.memory_space<vmem>>, vector<16x128xf32>
      tpu.vector_store %arg8[%c0_17, %c0_18], %19 {strides = array<i32>} : memref<16x128xf32, #tpu.memory_space<vmem>>, vector<16x128xf32>,
    } else {
    }
    %c0 = arith.constant 0 : index
    %c0_1 = arith.constant 0 : index
    %3 = vector.load %arg8[%c0, %c0_1] : memref<16x128xf32, #tpu.memory_space<vmem>>, vector<16x128xf32>
    %c0_2 = arith.constant 0 : index
    %c0_3 = arith.constant 0 : index
    %4 = vector.load %arg5[%c0_2, %c0_3] : memref<128x512xf32, #tpu.memory_space<vmem>>, vector<128x512xf32>
    %cst = arith.constant dense<0.000000e+00> : vector<16x512xf32>
    %5 = tpu.matmul %3, %4, %cst {dimension_numbers = #tpu.dot_dimension_numbers<[1], [0], [0], [1], [0, 0, 1, 1], [], []>} : vector<16x128xf32>, vector<128x512xf32>, vector<16x512xf32> -> vector<16x512xf32>
    %c0_4 = arith.constant 0 : index
    %c0_5 = arith.constant 0 : index
    %6 = vector.load %arg6[%c0_4, %c0_5] : memref<1x512xf32, #tpu.memory_space<vmem>>, vector<1x512xf32>
    %7 = vector.broadcast %6 : vector<1x512xf32> to vector<16x512xf32>
    %8 = arith.addf %5, %7 : vector<16x512xf32>
    %cst_6 = arith.constant 0.000000e+00 : f32
    %9 = vector.broadcast %cst_6 : f32 to vector<16x512xf32>
    %10 = arith.maximumf %8, %9 : vector<16x512xf32>
    %c0_7 = arith.constant 0 : index
    %c0_8 = arith.constant 0 : index
    %11 = vector.load %arg7[%c0_7, %c0_8] : memref<16x512xf32, #tpu.memory_space<vmem>>, vector<16x512xf32>
    tpu.vector_store %arg7[%c0_7, %c0_8], %10 {strides = array<i32>} : memref<16x512xf32, #tpu.memory_space<vmem>>, vector<16x512xf32>,
    return
  }
  func.func @transform_0(%arg0: i32, %arg1: i32) -> (i32, i32) {
    %c0_i32 = arith.constant 0 : i32
    %c0_i32_0 = arith.constant 0 : i32
    return %arg0, %c0_i32 : i32, i32
  }
  func.func @transform_1(%arg0: i32, %arg1: i32) -> (i32, i32) {
    %c0_i32 = arith.constant 0 : i32
    %c0_i32_0 = arith.constant 0 : i32
    %c0_i32_1 = arith.constant 0 : i32
    return %c0_i32, %c0_i32_0 : i32, i32
  }
  func.func @transform_2(%arg0: i32, %arg1: i32) -> (i32, i32) {
    %c0_i32 = arith.constant 0 : i32
    %c0_i32_0 = arith.constant 0 : i32
    %c0_i32_1 = arith.constant 0 : i32
    return %c0_i32, %c0_i32_0 : i32, i32
  }
  func.func @transform_3(%arg0: i32, %arg1: i32) -> (i32, i32) {
    %c0_i32 = arith.constant 0 : i32
    %c0_i32_0 = arith.constant 0 : i32
    return %c0_i32, %arg1 : i32, i32
  }
  func.func @transform_4(%arg0: i32, %arg1: i32) -> (i32, i32) {
    %c0_i32 = arith.constant 0 : i32
    %c0_i32_0 = arith.constant 0 : i32
    return %c0_i32, %arg1 : i32, i32
  }
  func.func @transform_5(%arg0: i32, %arg1: i32) -> (i32, i32) {
    %c0_i32 = arith.constant 0 : i32
    return %arg0, %arg1 : i32, i32
  }
}

module attributes {stable_mosaic.version = 11 : i64} {
  func.func @reconstruction_kernel(%arg0: i32, %arg1: i32, %arg2: memref<16x256xf32, #tpu.memory_space<vmem>>, %arg3: memref<256x128xf32, #tpu.memory_space<vmem>>, %arg4: memref<1x128xf32, #tpu.memory_space<vmem>>, %arg5: memref<128x512xf32, #tpu.memory_space<vmem>>, %arg6: memref<1x512xf32, #tpu.memory_space<vmem>>, %arg7: memref<16x512xf32, #tpu.memory_space<vmem>>, %arg8: memref<16x128xf32, #tpu.memory_space<vmem>>) attributes {dimension_semantics = [#tpu.dimension_semantics<parallel>, #tpu.dimension_semantics<arbitrary>], iteration_bounds = array<i64: 2, 1>, scalar_prefetch = 0 : i64, scratch_operands = 1 : i64, tpu.core_type = #tpu.core_type<tc>, window_params = [{transform_indices = @transform_0, window_bounds = array<i64: 16, 256>}, {pipeline_mode = #tpu.pipeline_mode<synchronous>, transform_indices = @transform_1, window_bounds = array<i64: 256, 128>}, {pipeline_mode = #tpu.pipeline_mode<synchronous>, transform_indices = @transform_2, window_bounds = array<i64: 1, 128>}, {transform_indices = @transform_3, window_bounds = array<i64: 128, 512>}, {transform_indices = @transform_4, window_bounds = array<i64: 1, 512>}, {transform_indices = @transform_5, window_bounds = array<i64: 16, 512>}]} {
    %c0_i32 = arith.constant 0 : i32
    %0 = arith.cmpi eq, %arg1, %c0_i32 : i32
    %1 = arith.extui %0 : i1 to i32
    %c0_i32_0 = arith.constant 0 : i32
    %2 = arith.cmpi ne, %1, %c0_i32_0 : i32
    scf.if %2 {
      %c0_9 = arith.constant 0 : index
      %c0_10 = arith.constant 0 : index
      %12 = vector.load %arg2[%c0_9, %c0_10] : memref<16x256xf32, #tpu.memory_space<vmem>>, vector<16x256xf32>
      %c0_11 = arith.constant 0 : index
      %c0_12 = arith.constant 0 : index
      %13 = vector.load %arg3[%c0_11, %c0_12] : memref<256x128xf32, #tpu.memory_space<vmem>>, vector<256x128xf32>
      %cst_13 = arith.constant dense<0.000000e+00> : vector<16x128xf32>
      %14 = tpu.matmul %12, %13, %cst_13 {dimension_numbers = #tpu.dot_dimension_numbers<[1], [0], [0], [1], [0, 0, 1, 1], [], []>} : vector<16x256xf32>, vector<256x128xf32>, vector<16x128xf32> -> vector<16x128xf32>
      %c0_14 = arith.constant 0 : index
      %c0_15 = arith.constant 0 : index
      %15 = vector.load %arg4[%c0_14, %c0_15] : memref<1x128xf32, #tpu.memory_space<vmem>>, vector<1x128xf32>
      %16 = vector.broadcast %15 : vector<1x128xf32> to vector<16x128xf32>
      %17 = arith.addf %14, %16 : vector<16x128xf32>
      %cst_16 = arith.constant 0.000000e+00 : f32
      %18 = vector.broadcast %cst_16 : f32 to vector<16x128xf32>
      %19 = arith.maximumf %17, %18 : vector<16x128xf32>
      %c0_17 = arith.constant 0 : index
      %c0_18 = arith.constant 0 : index
      %20 = vector.load %arg8[%c0_17, %c0_18] : memref<16x128xf32, #tpu.memory_space<vmem>>, vector<16x128xf32>
      tpu.vector_store %arg8[%c0_17, %c0_18], %19 {strides = array<i32>} : memref<16x128xf32, #tpu.memory_space<vmem>>, vector<16x128xf32>,
    } else {
    }
    %c0 = arith.constant 0 : index
    %c0_1 = arith.constant 0 : index
    %3 = vector.load %arg8[%c0, %c0_1] : memref<16x128xf32, #tpu.memory_space<vmem>>, vector<16x128xf32>
    %c0_2 = arith.constant 0 : index
    %c0_3 = arith.constant 0 : index
    %4 = vector.load %arg5[%c0_2, %c0_3] : memref<128x512xf32, #tpu.memory_space<vmem>>, vector<128x512xf32>
    %cst = arith.constant dense<0.000000e+00> : vector<16x512xf32>
    %5 = tpu.matmul %3, %4, %cst {dimension_numbers = #tpu.dot_dimension_numbers<[1], [0], [0], [1], [0, 0, 1, 1], [], []>} : vector<16x128xf32>, vector<128x512xf32>, vector<16x512xf32> -> vector<16x512xf32>
    %c0_4 = arith.constant 0 : index
    %c0_5 = arith.constant 0 : index
    %6 = vector.load %arg6[%c0_4, %c0_5] : memref<1x512xf32, #tpu.memory_space<vmem>>, vector<1x512xf32>
    %7 = vector.broadcast %6 : vector<1x512xf32> to vector<16x512xf32>
    %8 = arith.addf %5, %7 : vector<16x512xf32>
    %cst_6 = arith.constant 0.000000e+00 : f32
    %9 = vector.broadcast %cst_6 : f32 to vector<16x512xf32>
    %10 = arith.maximumf %8, %9 : vector<16x512xf32>
    %c0_7 = arith.constant 0 : index
    %c0_8 = arith.constant 0 : index
    %11 = vector.load %arg7[%c0_7, %c0_8] : memref<16x512xf32, #tpu.memory_space<vmem>>, vector<16x512xf32>
    tpu.vector_store %arg7[%c0_7, %c0_8], %10 {strides = array<i32>} : memref<16x512xf32, #tpu.memory_space<vmem>>, vector<16x512xf32>,
    return
  }
  func.func @transform_0(%arg0: i32, %arg1: i32) -> (i32, i32) {
    %c0_i32 = arith.constant 0 : i32
    %c0_i32_0 = arith.constant 0 : i32
    return %arg0, %c0_i32 : i32, i32
  }
  func.func @transform_1(%arg0: i32, %arg1: i32) -> (i32, i32) {
    %c0_i32 = arith.constant 0 : i32
    %c0_i32_0 = arith.constant 0 : i32
    %c0_i32_1 = arith.constant 0 : i32
    return %c0_i32, %c0_i32_0 : i32, i32
  }
  func.func @transform_2(%arg0: i32, %arg1: i32) -> (i32, i32) {
    %c0_i32 = arith.constant 0 : i32
    %c0_i32_0 = arith.constant 0 : i32
    %c0_i32_1 = arith.constant 0 : i32
    return %c0_i32, %c0_i32_0 : i32, i32
  }
  func.func @transform_3(%arg0: i32, %arg1: i32) -> (i32, i32) {
    %c0_i32 = arith.constant 0 : i32
    %c0_i32_0 = arith.constant 0 : i32
    return %c0_i32, %arg1 : i32, i32
  }
  func.func @transform_4(%arg0: i32, %arg1: i32) -> (i32, i32) {
    %c0_i32 = arith.constant 0 : i32
    %c0_i32_0 = arith.constant 0 : i32
    return %c0_i32, %arg1 : i32, i32
  }
  func.func @transform_5(%arg0: i32, %arg1: i32) -> (i32, i32) {
    %c0_i32 = arith.constant 0 : i32
    return %arg0, %arg1 : i32, i32
  }
}

</mosaic_0001>

<llo_original>
// kernel: tpu_custom_call.1
$region0: #{tpu_custom_call.1}
  #allocation0 [shape = 'u32[]', space=smem, size = 0x4, offset = 0x4, fixed_abs, tag = 'smem constant byte address 0x4 - core index']
  #allocation1 [shape = 'u32[144,128]{1,0:T(1,128)}', space=vmem, size = 0x12000, scoped, tag = 'internal scratch']
  #allocation2 [shape = 'f32[16,128]{1,0:T(8,128)}', space=vmem, size = 0x2000, scoped, tag = 'scratch operand']
  %s0 = inlined_call_operand.hbm [shape: f32[32,256], index: 0, kind: input, shape index: {}]
  %s1 = inlined_call_operand.hbm [shape: f32[256,128], index: 1, kind: input, shape index: {}]
  %s2 = inlined_call_operand.vmem [shape: f32[1,128], index: 2, kind: input, shape index: {}]
  %s3 = inlined_call_operand.hbm [shape: f32[128,512], index: 3, kind: input, shape index: {}]
  %s4 = inlined_call_operand.vmem [shape: f32[1,512], index: 4, kind: input, shape index: {}]
  %s5 = inlined_call_operand.hbm [shape: f32[32,512], index: 5, kind: output, shape index: {}]
  %s6 = sld [smem:[#allocation0]]
  $region69: #{tpu_custom_call.1} parent=0
    _
  %s8 = ssub.s32 1, %s6
  %s9 = scalar_select 0, %s8, %s6
  $region1: #{tpu_custom_call.1} parent=0
    #allocation3 [shape = 'u8[32768]{0}', space=vmem, size = 0x8000, scoped, tag = 'input window, operand 0']
    #allocation4 [shape = 's32[2]{0}', space=sflag, size = 0x8, scoped, tag = 'scoped memory for tpu_custom_call.1']
    #allocation5 [shape = 's32[2]{0}', space=sflag, size = 0x8, scoped, tag = 'scoped memory for tpu_custom_call.1']
    #allocation6 [shape = 'u8[131072]{0}', space=vmem, size = 0x20000, scoped, tag = 'input window, operand 1, single buffered']
    #allocation7 [shape = 's32[1]{0}', space=sflag, size = 0x4, scoped, tag = 'scoped memory for tpu_custom_call.1']
    #allocation8 [shape = 'u8[262144]{0}', space=vmem, size = 0x40000, scoped, tag = 'input window, operand 3, single buffered']
    #allocation9 [shape = 'u8[65536]{0}', space=vmem, size = 0x10000, scoped, tag = 'output window, operand 0']
    %10 = vsyncpa [#allocation4], 0
    %s11 = scalar_lea.sflag [#allocation4], 1
    %12 = vsyncpa %s11, 0
    %13 = vsyncpa [#allocation7], 0
    %14 = vsyncpa [#allocation5], 0
    %s15 = scalar_lea.sflag [#allocation5], 1
    %16 = vsyncpa %s15, 0
    loop: start=0, step=1, limit=4
    $region2: #{tpu_custom_call.1} parent=1 // loop_pre_header
      _
    $region3: #{tpu_custom_call.1} parent=1 // loop_header
      %s18 = sphi 0, %s22
      %p19 = scmp.ge.s32.totalorder %s18, 4
      %s25 = sphi 0, %s37
      %s26 = sphi 0, %s33
      %s27 = sphi 0, %s25
      %s28 = sphi 0, %s26
      %s29 = sphi 0, %s27
      %s30 = sphi 0, %s28
      %s40 = sphi 0, %s42
      %s43 = sphi 0, %s40
      %s44 = sphi 0, %s43
      %s60 = sphi 0, %s44
      %s64 = sphi 0, %s64
      %s66 = sphi 0, %s64
      %s67 = sphi 0, %s66
      %s81 = sphi 0, %s67
      %s85 = sphi 0, %s85
      %s87 = sphi 0, %s85
      %s88 = sphi 0, %s87
      %s102 = sphi 0, %s88
      %s108 = sphi 0, %s110
      %s111 = sphi 0, %s108
      %s112 = sphi 0, %s111
      %s128 = sphi 0, %s112
      %s134 = sphi 0, %s136
      %s137 = sphi 0, %s134
      %s138 = sphi 0, %s137
      %s154 = sphi 0, %s138
      %s162 = sphi 0, %s164
      %s165 = sphi 0, %s162
      %s166 = sphi 0, %s165
      %s182 = sphi 0, %s166
    $region4: #{tpu_custom_call.1} parent=1 // loop_header_branch
      %21 = sbr.rel (%p19) target = $region8
    $region5: #{tpu_custom_call.1} parent=1 // loop_body
      %s23 = ssub.s32 %s18, 1
      %s24 = ssub.s32 %s18, 2
      %s31 = sadd.s32 1, %s26
      %p32 = scmp.ge.s32.totalorder %s31, 1
      %s33 = scalar_select %p32, 0, %s31
      %s34 = sadd.s32 1, %s25
      %s35 = scalar_select %p32, %s34, %s25
      %p36 = scmp.ge.s32.totalorder %s35, 2
      %s37 = scalar_select %p36, 0, %s35
      %s38 = ssub.s32 %s25, %s37
      %p39 = scmp.eq.s32.totalorder %s38, 0
      %s41 = sadd.s32 %s40, 1
      %s42 = scalar_select %p39, %s40, %s41
      %p45 = pneg %p39
      %p46 = scmp.eq.s32.totalorder %s18, 1
      %p47 = por %p45, %p46
      %p48 = scmp.ne.s32.totalorder %s40, %s43
      %p49 = scmp.eq.s32.totalorder %s18, 0
      %p50 = por %p48, %p49
      %p51 = scmp.ne.s32.totalorder %s40, %s43
      %p52 = scmp.eq.s32.totalorder %s23, 1
      %p53 = por %p51, %p52
      %p54 = scmp.ne.s32.totalorder %s43, %s44
      %p55 = scmp.eq.s32.totalorder %s23, 0
      %p56 = por %p54, %p55
      %p57 = scmp.ne.s32.totalorder %s43, %s44
      %p58 = scmp.eq.s32.totalorder %s24, 1
      %p59 = por %p57, %p58
      %p61 = scmp.ne.s32.totalorder %s44, %s60
      %p62 = scmp.eq.s32.totalorder %s24, 0
      %p63 = por %p61, %p62
      %s65 = sadd.s32 %s64, 1
      %p68 = scmp.eq.s32.totalorder %s18, 1
      %p69 = scmp.ne.s32.totalorder %s64, %s66
      %p70 = scmp.eq.s32.totalorder %s18, 0
      %p71 = por %p69, %p70
      %p72 = scmp.ne.s32.totalorder %s64, %s66
      %p73 = scmp.eq.s32.totalorder %s23, 1
      %p74 = por %p72, %p73
      %p75 = scmp.ne.s32.totalorder %s66, %s67
      %p76 = scmp.eq.s32.totalorder %s23, 0
      %p77 = por %p75, %p76
      %p78 = scmp.ne.s32.totalorder %s66, %s67
      %p79 = scmp.eq.s32.totalorder %s24, 1
      %p80 = por %p78, %p79
      %p82 = scmp.ne.s32.totalorder %s67, %s81
      %p83 = scmp.eq.s32.totalorder %s24, 0
      %p84 = por %p82, %p83
      %s86 = sadd.s32 %s85, 1
      %p89 = scmp.eq.s32.totalorder %s18, 1
      %p90 = scmp.ne.s32.totalorder %s85, %s87
      %p91 = scmp.eq.s32.totalorder %s18, 0
      %p92 = por %p90, %p91
      %p93 = scmp.ne.s32.totalorder %s85, %s87
      %p94 = scmp.eq.s32.totalorder %s23, 1
      %p95 = por %p93, %p94
      %p96 = scmp.ne.s32.totalorder %s87, %s88
      %p97 = scmp.eq.s32.totalorder %s23, 0
      %p98 = por %p96, %p97
      %p99 = scmp.ne.s32.totalorder %s87, %s88
      %p100 = scmp.eq.s32.totalorder %s24, 1
      %p101 = por %p99, %p100
      %p103 = scmp.ne.s32.totalorder %s88, %s102
      %p104 = scmp.eq.s32.totalorder %s24, 0
      %p105 = por %p103, %p104
      %s106 = ssub.s32 %s26, %s33
      %p107 = scmp.eq.s32.totalorder %s106, 0
      %s109 = sadd.s32 %s108, 1
      %s110 = scalar_select %p107, %s108, %s109
      %p113 = pneg %p107
      %p114 = scmp.eq.s32.totalorder %s18, 1
      %p115 = por %p113, %p114
      %p116 = scmp.ne.s32.totalorder %s108, %s111
      %p117 = scmp.eq.s32.totalorder %s18, 0
      %p118 = por %p116, %p117
      %p119 = scmp.ne.s32.totalorder %s108, %s111
      %p120 = scmp.eq.s32.totalorder %s23, 1
      %p121 = por %p119, %p120
      %p122 = scmp.ne.s32.totalorder %s111, %s112
      %p123 = scmp.eq.s32.totalorder %s23, 0
      %p124 = por %p122, %p123
      %p125 = scmp.ne.s32.totalorder %s111, %s112
      %p126 = scmp.eq.s32.totalorder %s24, 1
      %p127 = por %p125, %p126
      %p129 = scmp.ne.s32.totalorder %s112, %s128
      %p130 = scmp.eq.s32.totalorder %s24, 0
      %p131 = por %p129, %p130
      %s132 = ssub.s32 %s26, %s33
      %p133 = scmp.eq.s32.totalorder %s132, 0
      %s135 = sadd.s32 %s134, 1
      %s136 = scalar_select %p133, %s134, %s135
      %p139 = pneg %p133
      %p140 = scmp.eq.s32.totalorder %s18, 1
      %p141 = por %p139, %p140
      %p142 = scmp.ne.s32.totalorder %s134, %s137
      %p143 = scmp.eq.s32.totalorder %s18, 0
      %p144 = por %p142, %p143
      %p145 = scmp.ne.s32.totalorder %s134, %s137
      %p146 = scmp.eq.s32.totalorder %s23, 1
      %p147 = por %p145, %p146
      %p148 = scmp.ne.s32.totalorder %s137, %s138
      %p149 = scmp.eq.s32.totalorder %s23, 0
      %p150 = por %p148, %p149
      %p151 = scmp.ne.s32.totalorder %s137, %s138
      %p152 = scmp.eq.s32.totalorder %s24, 1
      %p153 = por %p151, %p152
      %p155 = scmp.ne.s32.totalorder %s138, %s154
      %p156 = scmp.eq.s32.totalorder %s24, 0
      %p157 = por %p155, %p156
      %s158 = ssub.s32 %s25, %s37
      %s159 = ssub.s32 %s26, %s33
      %s160 = sor.u32 %s158, %s159
      %p161 = scmp.eq.s32.totalorder %s160, 0
      %s163 = sadd.s32 %s162, 1
      %s164 = scalar_select %p161, %s162, %s163
      %p167 = pneg %p161
      %p168 = scmp.eq.s32.totalorder %s18, 1
      %p169 = por %p167, %p168
      %p170 = scmp.ne.s32.totalorder %s162, %s165
      %p171 = scmp.eq.s32.totalorder %s18, 0
      %p172 = por %p170, %p171
      %p173 = scmp.ne.s32.totalorder %s162, %s165
      %p174 = scmp.eq.s32.totalorder %s23, 1
      %p175 = por %p173, %p174
      %p176 = scmp.ne.s32.totalorder %s165, %s166
      %p177 = scmp.eq.s32.totalorder %s23, 0
      %p178 = por %p176, %p177
      %p179 = scmp.ne.s32.totalorder %s165, %s166
      %p180 = scmp.eq.s32.totalorder %s24, 1
      %p181 = por %p179, %p180
      %p183 = scmp.ne.s32.totalorder %s166, %s182
      %p184 = scmp.eq.s32.totalorder %s24, 0
      %p185 = por %p183, %p184
      %p186 = scmp.le.s32.totalorder 1, %s18
      %p187 = scmp.lt.s32.totalorder %s18, 3
      %p188 = pnand %p186, %p187
      %p189 = pneg %p188
      // Predicated region
      $region9: #{tpu_custom_call.1} parent=5 // pred_check
        _
      $region10: #{tpu_custom_call.1} parent=5 // pred_check_branch
        %191 = sbr.rel (%p188) target = $region12
      $region11: #{tpu_custom_call.1} parent=5 // pred_region
        %s192 = ssub.s32 %s18, 1
        // Predicated region
        $region13: #{tpu_custom_call.1} parent=11 // pred_check
          %p193 = pneg %p77
        $region14: #{tpu_custom_call.1} parent=11 // pred_check_branch
          %195 = sbr.rel (%p193) target = $region16
        $region15: #{tpu_custom_call.1} parent=11 // pred_region
          %s197 = ssub.s32 4096, 4096
          %198 = vsyncadd [#allocation7], %s197
          %s199 = sshll.u32 [#allocation6], 4
          %s200 = int_to_ptr.vmem [resolvable:$true] %s199
          %205 = dma.hbm_to_vmem [thread:$0]  %s1, 4096, %s200, [#allocation7], 128, 128, 8
        $region16: #{tpu_custom_call.1} parent=11 // pred_fallthru
          _
        // Predicated region
        $region17: #{tpu_custom_call.1} parent=11 // pred_check
          %p206 = pneg %p98
        $region18: #{tpu_custom_call.1} parent=11 // pred_check_branch
          %208 = sbr.rel (%p206) target = $region20
        $region19: #{tpu_custom_call.1} parent=11 // pred_region
          _
        $region20: #{tpu_custom_call.1} parent=11 // pred_fallthru
          _
        // Predicated region
        $region21: #{tpu_custom_call.1} parent=11 // pred_check
          %p209 = pneg %p124
        $region22: #{tpu_custom_call.1} parent=11 // pred_check_branch
          %211 = sbr.rel (%p209) target = $region24
        $region23: #{tpu_custom_call.1} parent=11 // pred_region
          %s212 = smul.u32 4, %s28
          %s214 = ssub.s32 8192, 8192
          %215 = vsyncadd [#allocation7], %s214
          %s216 = smul.addr %s212, 128
          %s217 = scalar_lea.hbm %s3, %s216
          %s218 = sshll.u32 [#allocation8], 4
          %s219 = int_to_ptr.vmem [resolvable:$true] %s218
          %224 = dma.hbm_to_vmem [thread:$0]  %s217, 8192, %s219, [#allocation7], 512, 512, 32
        $region24: #{tpu_custom_call.1} parent=11 // pred_fallthru
          _
        // Predicated region
        $region25: #{tpu_custom_call.1} parent=11 // pred_check
          %p225 = pneg %p150
        $region26: #{tpu_custom_call.1} parent=11 // pred_check_branch
          %227 = sbr.rel (%p225) target = $region28
        $region27: #{tpu_custom_call.1} parent=11 // pred_region
          %s228 = smul.u32 4, %s28
          %p229 = scmp.lt.s32.totalorder %s228, 3
          %s230 = scalar_select %p229, %s228, 3
          %s231 = scalar_lea.vmem %s4, %s230
          %s232 = smul.u32 4, %s28
        $region28: #{tpu_custom_call.1} parent=11 // pred_fallthru
          _
      $region12: #{tpu_custom_call.1} parent=5 // pred_fallthru
        _
      %p233 = scmp.lt.s32.totalorder %s18, 2
      // Predicated region
      $region29: #{tpu_custom_call.1} parent=5 // pred_check
        %p234 = pneg %p233
      $region30: #{tpu_custom_call.1} parent=5 // pred_check_branch
        %236 = sbr.rel (%p234) target = $region32
      $region31: #{tpu_custom_call.1} parent=5 // pred_region
        // Predicated region
        $region33: #{tpu_custom_call.1} parent=31 // pred_check
          %p237 = pneg %p50
        $region34: #{tpu_custom_call.1} parent=31 // pred_check_branch
          %239 = sbr.rel (%p237) target = $region36
        $region35: #{tpu_custom_call.1} parent=31 // pred_region
          %s240 = sand.u32 %s40, 1
          %s241 = scalar_lea.sflag [#allocation4], %s240
          %s242 = sand.u32 %s40, 1
          %s243 = smul.addr %s242, 32
          %s244 = scalar_lea.vmem [#allocation3], %s243
          %s245 = smul.u32 2, %s25
          %s247 = ssub.s32 512, 512
          %248 = vsyncadd %s241, %s247
          %s249 = smul.addr %s245, 2
          %s250 = smul.addr %s249, 128
          %s251 = scalar_lea.hbm %s0, %s250
          %s252 = sshll.u32 %s244, 4
          %s253 = int_to_ptr.vmem [resolvable:$true] %s252
          %258 = dma.hbm_to_vmem [thread:$0]  %s251, 512, %s253, %s241, 256, 256, 16
        $region36: #{tpu_custom_call.1} parent=31 // pred_fallthru
          _
      $region32: #{tpu_custom_call.1} parent=5 // pred_fallthru
        _
      %p259 = scmp.le.s32.totalorder 1, %s18
      %p260 = scmp.lt.s32.totalorder %s18, 3
      %p261 = pnand %p259, %p260
      %p262 = pneg %p261
      // Predicated region
      $region37: #{tpu_custom_call.1} parent=5 // pred_check
        _
      $region38: #{tpu_custom_call.1} parent=5 // pred_check_branch
        %264 = sbr.rel (%p261) target = $region40
      $region39: #{tpu_custom_call.1} parent=5 // pred_region
        %s265 = ssub.s32 %s18, 1
        %s266 = sand.u32 %s43, 1
        %s267 = scalar_lea.sflag [#allocation4], %s266
        %s268 = sand.u32 %s43, 1
        %s269 = smul.addr %s268, 32
        %s270 = scalar_lea.vmem [#allocation3], %s269
        // Predicated region
        $region41: #{tpu_custom_call.1} parent=39 // pred_check
          %p271 = pneg %p56
        $region42: #{tpu_custom_call.1} parent=39 // pred_check_branch
          %273 = sbr.rel (%p271) target = $region44
        $region43: #{tpu_custom_call.1} parent=39 // pred_region
          %274 = dma.done %s267, 512
        $region44: #{tpu_custom_call.1} parent=39 // pred_fallthru
          _
        // Predicated region
        $region45: #{tpu_custom_call.1} parent=39 // pred_check
          %p275 = pneg %p77
        $region46: #{tpu_custom_call.1} parent=39 // pred_check_branch
          %277 = sbr.rel (%p275) target = $region48
        $region47: #{tpu_custom_call.1} parent=39 // pred_region
          %278 = dma.done [#allocation7], 4096
        $region48: #{tpu_custom_call.1} parent=39 // pred_fallthru
          _
        // Predicated region
        $region49: #{tpu_custom_call.1} parent=39 // pred_check
          %p279 = pneg %p124
        $region50: #{tpu_custom_call.1} parent=39 // pred_check_branch
          %281 = sbr.rel (%p279) target = $region52
        $region51: #{tpu_custom_call.1} parent=39 // pred_region
          %282 = dma.done [#allocation7], 8192
        $region52: #{tpu_custom_call.1} parent=39 // pred_fallthru
          _
        %s283 = sand.u32 %s43, 1
        %s284 = scalar_lea.sflag [#allocation4], %s283
        %s285 = sand.u32 %s43, 1
        %s286 = smul.addr %s285, 32
        %s287 = scalar_lea.vmem [#allocation3], %s286
        %p288 = pneg %p56
        %p289 = pneg %p53
        %p290 = pneg %p77
        %p291 = pneg %p74
        %p292 = pneg %p98
        %p293 = pneg %p95
        %p294 = pneg %p124
        %p295 = pneg %p121
        %s296 = smul.u32 4, %s28
        %p297 = scmp.lt.s32.totalorder %s296, 3
        %s298 = scalar_select %p297, %s296, 3
        %s299 = scalar_lea.vmem %s4, %s298
        %p300 = pneg %p150
        %p301 = pneg %p147
        %p302 = pneg %p178
        %p303 = pneg %p175
        %s304 = sand.u32 %s165, 1
        %s305 = scalar_lea.sflag [#allocation5], %s304
        %s306 = sand.u32 %s165, 1
        %s307 = smul.addr %s306, 64
        %s308 = scalar_lea.vmem [#allocation9], %s307
        %s309 = smul.u32 2, %s27
        %s310 = smul.u32 4, %s28
        %s311 = smul.u32 4, %s28
        %p312 = scmp.lt.s32.totalorder %s311, 3
        %s313 = scalar_select %p312, %s311, 3
        %s314 = scalar_lea.vmem %s4, %s313
        %s315 = smul.u32 4, %s28
        %s316 = smul.u32 2, %s27
        %s317 = smul.u32 4, %s28
        %p318 = scmp.eq.s32.totalorder %s28, 0
        // Predicated region
        $region53: #{tpu_custom_call.1} parent=39 // pred_check
          %p319 = pneg %p318
        $region54: #{tpu_custom_call.1} parent=39 // pred_check_branch
          %321 = sbr.rel (%p319) target = $region56
        $region55: #{tpu_custom_call.1} parent=39 // pred_region
          %v322 = vld [vmem:[%s270] sm:$0xff]
          %v323 = vld [vmem:[%s270 + $0x8] sm:$0xff]
          %v324 = vld [vmem:[%s270 + $0x10] sm:$0xff]
          %v325 = vld [vmem:[%s270 + $0x18] sm:$0xff]
          %v326 = vld [vmem:[#allocation6] sm:$0xff]
          %v327 = vld [vmem:[#allocation6 + $0x8] sm:$0xff]
          %v328 = vld [vmem:[#allocation6 + $0x10] sm:$0xff]
          %v329 = vld [vmem:[#allocation6 + $0x18] sm:$0xff]
          %v330 = vld [vmem:[#allocation6 + $0x20] sm:$0xff]
          %v331 = vld [vmem:[#allocation6 + $0x28] sm:$0xff]
          %v332 = vld [vmem:[#allocation6 + $0x30] sm:$0xff]
          %v333 = vld [vmem:[#allocation6 + $0x38] sm:$0xff]
          %v334 = vld [vmem:[#allocation6 + $0x40] sm:$0xff]
          %v335 = vld [vmem:[#allocation6 + $0x48] sm:$0xff]
          %v336 = vld [vmem:[#allocation6 + $0x50] sm:$0xff]
          %v337 = vld [vmem:[#allocation6 + $0x58] sm:$0xff]
          %v338 = vld [vmem:[#allocation6 + $0x60] sm:$0xff]
          %v339 = vld [vmem:[#allocation6 + $0x68] sm:$0xff]
          %v340 = vld [vmem:[#allocation6 + $0x70] sm:$0xff]
          %v341 = vld [vmem:[#allocation6 + $0x78] sm:$0xff]
          %v342 = vld [vmem:[#allocation6 + $0x80] sm:$0xff]
          %v343 = vld [vmem:[#allocation6 + $0x88] sm:$0xff]
          %v344 = vld [vmem:[#allocation6 + $0x90] sm:$0xff]
          %v345 = vld [vmem:[#allocation6 + $0x98] sm:$0xff]
          %v346 = vld [vmem:[#allocation6 + $0xa0] sm:$0xff]
          %v347 = vld [vmem:[#allocation6 + $0xa8] sm:$0xff]
          %v348 = vld [vmem:[#allocation6 + $0xb0] sm:$0xff]
          %v349 = vld [vmem:[#allocation6 + $0xb8] sm:$0xff]
          %v350 = vld [vmem:[#allocation6 + $0xc0] sm:$0xff]
          %v351 = vld [vmem:[#allocation6 + $0xc8] sm:$0xff]
          %v352 = vld [vmem:[#allocation6 + $0xd0] sm:$0xff]
          %v353 = vld [vmem:[#allocation6 + $0xd8] sm:$0xff]
          %v354 = vld [vmem:[#allocation6 + $0xe0] sm:$0xff]
          %v355 = vld [vmem:[#allocation6 + $0xe8] sm:$0xff]
          %v356 = vld [vmem:[#allocation6 + $0xf0] sm:$0xff]
          %v357 = vld [vmem:[#allocation6 + $0xf8] sm:$0xff]
          %v358 = vld [vmem:[%s2] sm:$0x1]
          %v360 = vlaneseq
          %v361 = vshrl.u32 %v360, 7
          %v362 = vsub.s32 0, %v361
          %v363 = vrot.slane %v358, %v362
          %365 = vmatprep.subr.mxu0 0.0
          %366 = vmatpush1.msra.mxu0 %v326
          %367 = vmatprep.subr.mxu0 0.0
          %368 = vmatpush1.msra.mxu0 %v327
          %369 = vmatprep.subr.mxu0 0.0
          %370 = vmatpush1.msra.mxu0 %v328
          %371 = vmatprep.subr.mxu0 0.0
          %372 = vmatpush1.msra.mxu0 %v329
          %373 = vmatprep.subr.mxu0 0.0
          %374 = vmatpush1.msra.mxu0 %v330
          %375 = vmatprep.subr.mxu0 0.0
          %376 = vmatpush1.msra.mxu0 %v331
          %377 = vmatprep.subr.mxu0 0.0
          %378 = vmatpush1.msra.mxu0 %v332
          %379 = vmatprep.subr.mxu0 0.0
          %380 = vmatpush1.msra.mxu0 %v333
          %381 = vmatprep.subr.mxu0 0.0
          %382 = vmatpush1.msra.mxu0 %v334
          %383 = vmatprep.subr.mxu0 0.0
          %384 = vmatpush1.msra.mxu0 %v335
          %385 = vmatprep.subr.mxu0 0.0
          %386 = vmatpush1.msra.mxu0 %v336
          %387 = vmatprep.subr.mxu0 0.0
          %388 = vmatpush1.msra.mxu0 %v337
          %389 = vmatprep.subr.mxu0 0.0
          %390 = vmatpush1.msra.mxu0 %v338
          %391 = vmatprep.subr.mxu0 0.0
          %392 = vmatpush1.msra.mxu0 %v339
          %393 = vmatprep.subr.mxu0 0.0
          %394 = vmatpush1.msra.mxu0 %v340
          %395 = vmatprep.subr.mxu0 0.0
          %396 = vmatpush1.msra.mxu0 %v341
          %397 = vmatprep.subr.mxu0 0.0
          %398 = vmatpush1.msra.mxu0 %v342
          %399 = vmatprep.subr.mxu0 0.0
          %400 = vmatpush1.msra.mxu0 %v343
          %401 = vmatprep.subr.mxu0 0.0
          %402 = vmatpush1.msra.mxu0 %v344
          %403 = vmatprep.subr.mxu0 0.0
          %404 = vmatpush1.msra.mxu0 %v345
          %405 = vmatprep.subr.mxu0 0.0
          %406 = vmatpush1.msra.mxu0 %v346
          %407 = vmatprep.subr.mxu0 0.0
          %408 = vmatpush1.msra.mxu0 %v347
          %409 = vmatprep.subr.mxu0 0.0
          %410 = vmatpush1.msra.mxu0 %v348
          %411 = vmatprep.subr.mxu0 0.0
          %412 = vmatpush1.msra.mxu0 %v349
          %413 = vmatprep.subr.mxu0 0.0
          %414 = vmatpush1.msra.mxu0 %v350
          %415 = vmatprep.subr.mxu0 0.0
          %416 = vmatpush1.msra.mxu0 %v351
          %417 = vmatprep.subr.mxu0 0.0
          %418 = vmatpush1.msra.mxu0 %v352
          %419 = vmatprep.subr.mxu0 0.0
          %420 = vmatpush1.msra.mxu0 %v353
          %421 = vmatprep.subr.mxu0 0.0
          %422 = vmatpush1.msra.mxu0 %v354
          %423 = vmatprep.subr.mxu0 0.0
          %424 = vmatpush1.msra.mxu0 %v355
          %425 = vmatprep.subr.mxu0 0.0
          %426 = vmatpush1.msra.mxu0 %v356
          %427 = vmatprep.subr.mxu0 0.0
          %428 = vmatpush1.msra.mxu0 %v357
          %429 = vmatprep.mubr.f32.mxu0 %v323
          %430 = vmatmul.mubr.f32.gmra.mrb[0].mxu0 %v322
          %v431 = vpop.f32.mrb[0].mxu0
          %v432 = vadd.f32 %v363, %v431
          %v433 = vpop.f32.mrb[0].mxu0
          %434 = vmatprep.mubr.f32.mxu0 %v325
          %435 = vmatmul.mubr.f32.gmra.mrb[0].mxu0 %v324
          %v436 = vpop.f32.mrb[0].mxu0
          %v437 = vadd.f32 %v363, %v436
          %v438 = vpop.f32.mrb[0].mxu0
          %439 = vdwg.mxu0
          %v440 = vmax.f32 %v432, 0.0
          %v441 = vmax.f32 %v437, 0.0
          %442 = vst [vmem:[#allocation2] sm:$0xff] %v440
          %443 = vst [vmem:[#allocation2 + $0x8] sm:$0xff] %v441
        $region56: #{tpu_custom_call.1} parent=39 // pred_fallthru
          _
        %v444 = vld [vmem:[#allocation2] sm:$0xff]
        %v445 = vld [vmem:[#allocation2 + $0x8] sm:$0xff]
        %v446 = vld [vmem:[#allocation8] sm:$0xff]
        %v447 = vld [vmem:[#allocation8 + $0x8] sm:$0xff]
        %v448 = vld [vmem:[#allocation8 + $0x10] sm:$0xff]
        %v449 = vld [vmem:[#allocation8 + $0x18] sm:$0xff]
        %v450 = vld [vmem:[#allocation8 + $0x20] sm:$0xff]
        %v451 = vld [vmem:[#allocation8 + $0x28] sm:$0xff]
        %v452 = vld [vmem:[#allocation8 + $0x30] sm:$0xff]
        %v453 = vld [vmem:[#allocation8 + $0x38] sm:$0xff]
        %v454 = vld [vmem:[#allocation8 + $0x40] sm:$0xff]
        %v455 = vld [vmem:[#allocation8 + $0x48] sm:$0xff]
        %v456 = vld [vmem:[#allocation8 + $0x50] sm:$0xff]
        %v457 = vld [vmem:[#allocation8 + $0x58] sm:$0xff]
        %v458 = vld [vmem:[#allocation8 + $0x60] sm:$0xff]
        %v459 = vld [vmem:[#allocation8 + $0x68] sm:$0xff]
        %v460 = vld [vmem:[#allocation8 + $0x70] sm:$0xff]
        %v461 = vld [vmem:[#allocation8 + $0x78] sm:$0xff]
        %v462 = vld [vmem:[#allocation8 + $0x80] sm:$0xff]
        %v463 = vld [vmem:[#allocation8 + $0x88] sm:$0xff]
        %v464 = vld [vmem:[#allocation8 + $0x90] sm:$0xff]
        %v465 = vld [vmem:[#allocation8 + $0x98] sm:$0xff]
        %v466 = vld [vmem:[#allocation8 + $0xa0] sm:$0xff]
        %v467 = vld [vmem:[#allocation8 + $0xa8] sm:$0xff]
        %v468 = vld [vmem:[#allocation8 + $0xb0] sm:$0xff]
        %v469 = vld [vmem:[#allocation8 + $0xb8] sm:$0xff]
        %v470 = vld [vmem:[#allocation8 + $0xc0] sm:$0xff]
        %v471 = vld [vmem:[#allocation8 + $0xc8] sm:$0xff]
        %v472 = vld [vmem:[#allocation8 + $0xd0] sm:$0xff]
        %v473 = vld [vmem:[#allocation8 + $0xd8] sm:$0xff]
        %v474 = vld [vmem:[#allocation8 + $0xe0] sm:$0xff]
        %v475 = vld [vmem:[#allocation8 + $0xe8] sm:$0xff]
        %v476 = vld [vmem:[#allocation8 + $0xf0] sm:$0xff]
        %v477 = vld [vmem:[#allocation8 + $0xf8] sm:$0xff]
        %v478 = vld [vmem:[#allocation8 + $0x100] sm:$0xff]
        %v479 = vld [vmem:[#allocation8 + $0x108] sm:$0xff]
        %v480 = vld [vmem:[#allocation8 + $0x110] sm:$0xff]
        %v481 = vld [vmem:[#allocation8 + $0x118] sm:$0xff]
        %v482 = vld [vmem:[#allocation8 + $0x120] sm:$0xff]
        %v483 = vld [vmem:[#allocation8 + $0x128] sm:$0xff]
        %v484 = vld [vmem:[#allocation8 + $0x130] sm:$0xff]
        %v485 = vld [vmem:[#allocation8 + $0x138] sm:$0xff]
        %v486 = vld [vmem:[#allocation8 + $0x140] sm:$0xff]
        %v487 = vld [vmem:[#allocation8 + $0x148] sm:$0xff]
        %v488 = vld [vmem:[#allocation8 + $0x150] sm:$0xff]
        %v489 = vld [vmem:[#allocation8 + $0x158] sm:$0xff]
        %v490 = vld [vmem:[#allocation8 + $0x160] sm:$0xff]
        %v491 = vld [vmem:[#allocation8 + $0x168] sm:$0xff]
        %v492 = vld [vmem:[#allocation8 + $0x170] sm:$0xff]
        %v493 = vld [vmem:[#allocation8 + $0x178] sm:$0xff]
        %v494 = vld [vmem:[#allocation8 + $0x180] sm:$0xff]
        %v495 = vld [vmem:[#allocation8 + $0x188] sm:$0xff]
        %v496 = vld [vmem:[#allocation8 + $0x190] sm:$0xff]
        %v497 = vld [vmem:[#allocation8 + $0x198] sm:$0xff]
        %v498 = vld [vmem:[#allocation8 + $0x1a0] sm:$0xff]
        %v499 = vld [vmem:[#allocation8 + $0x1a8] sm:$0xff]
        %v500 = vld [vmem:[#allocation8 + $0x1b0] sm:$0xff]
        %v501 = vld [vmem:[#allocation8 + $0x1b8] sm:$0xff]
        %v502 = vld [vmem:[#allocation8 + $0x1c0] sm:$0xff]
        %v503 = vld [vmem:[#allocation8 + $0x1c8] sm:$0xff]
        %v504 = vld [vmem:[#allocation8 + $0x1d0] sm:$0xff]
        %v505 = vld [vmem:[#allocation8 + $0x1d8] sm:$0xff]
        %v506 = vld [vmem:[#allocation8 + $0x1e0] sm:$0xff]
        %v507 = vld [vmem:[#allocation8 + $0x1e8] sm:$0xff]
        %v508 = vld [vmem:[#allocation8 + $0x1f0] sm:$0xff]
        %v509 = vld [vmem:[#allocation8 + $0x1f8] sm:$0xff]
        %v510 = vld [vmem:[%s314] sm:$0xf]
        %v512 = vlaneseq
        %v513 = vshrl.u32 %v512, 7
        %v514 = vsub.s32 0, %v513
        %v515 = vrot.slane %v510, %v514
        %v516 = vlaneseq
        %v517 = vshrl.u32 %v516, 7
        %v518 = vsub.s32 1, %v517
        %v519 = vrot.slane %v510, %v518
        %v520 = vlaneseq
        %v521 = vshrl.u32 %v520, 7
        %v522 = vsub.s32 2, %v521
        %v523 = vrot.slane %v510, %v522
        %v524 = vlaneseq
        %v525 = vshrl.u32 %v524, 7
        %v526 = vsub.s32 3, %v525
        %v527 = vrot.slane %v510, %v526
        %532 = vmatprep.subr.mxu0 %v447
        %533 = vmatpush1.msra.mxu0 %v446
        %534 = vmatprep.subr.mxu0 %v451
        %535 = vmatpush1.msra.mxu0 %v450
        %536 = vmatprep.subr.mxu0 %v455
        %537 = vmatpush1.msra.mxu0 %v454
        %538 = vmatprep.subr.mxu0 %v459
        %539 = vmatpush1.msra.mxu0 %v458
        %540 = vmatprep.subr.mxu0 %v463
        %541 = vmatpush1.msra.mxu0 %v462
        %542 = vmatprep.subr.mxu0 %v467
        %543 = vmatpush1.msra.mxu0 %v466
        %544 = vmatprep.subr.mxu0 %v471
        %545 = vmatpush1.msra.mxu0 %v470
        %546 = vmatprep.subr.mxu0 %v475
        %547 = vmatpush1.msra.mxu0 %v474
        %548 = vmatprep.subr.mxu0 %v479
        %549 = vmatpush1.msra.mxu0 %v478
        %550 = vmatprep.subr.mxu0 %v483
        %551 = vmatpush1.msra.mxu0 %v482
        %552 = vmatprep.subr.mxu0 %v487
        %553 = vmatpush1.msra.mxu0 %v486
        %554 = vmatprep.subr.mxu0 %v491
        %555 = vmatpush1.msra.mxu0 %v490
        %556 = vmatprep.subr.mxu0 %v495
        %557 = vmatpush1.msra.mxu0 %v494
        %558 = vmatprep.subr.mxu0 %v499
        %559 = vmatpush1.msra.mxu0 %v498
        %560 = vmatprep.subr.mxu0 %v503
        %561 = vmatpush1.msra.mxu0 %v502
        %562 = vmatprep.subr.mxu0 %v507
        %563 = vmatpush1.msra.mxu0 %v506
        %564 = vmatprep.subr.mxu0 0.0
        %565 = vmatpush1.msra.mxu0 0.0
        %566 = vmatprep.subr.mxu0 0.0
        %567 = vmatpush1.msra.mxu0 0.0
        %568 = vmatprep.subr.mxu0 0.0
        %569 = vmatpush1.msra.mxu0 0.0
        %570 = vmatprep.subr.mxu0 0.0
        %571 = vmatpush1.msra.mxu0 0.0
        %572 = vmatprep.subr.mxu0 0.0
        %573 = vmatpush1.msra.mxu0 0.0
        %574 = vmatprep.subr.mxu0 0.0
        %575 = vmatpush1.msra.mxu0 0.0
        %576 = vmatprep.subr.mxu0 0.0
        %577 = vmatpush1.msra.mxu0 0.0
        %578 = vmatprep.subr.mxu0 0.0
        %579 = vmatpush1.msra.mxu0 0.0
        %580 = vmatprep.subr.mxu0 0.0
        %581 = vmatpush1.msra.mxu0 0.0
        %582 = vmatprep.subr.mxu0 0.0
        %583 = vmatpush1.msra.mxu0 0.0
        %584 = vmatprep.subr.mxu0 0.0
        %585 = vmatpush1.msra.mxu0 0.0
        %586 = vmatprep.subr.mxu0 0.0
        %587 = vmatpush1.msra.mxu0 0.0
        %588 = vmatprep.subr.mxu0 0.0
        %589 = vmatpush1.msra.mxu0 0.0
        %590 = vmatprep.subr.mxu0 0.0
        %591 = vmatpush1.msra.mxu0 0.0
        %592 = vmatprep.subr.mxu0 0.0
        %593 = vmatpush1.msra.mxu0 0.0
        %594 = vmatprep.subr.mxu0 0.0
        %595 = vmatpush1.msra.mxu0 0.0
        %596 = vmatprep.mubr.f32.mxu0 0.0
        %597 = vmatmul.mubr.f32.gmra.mrb[0].mxu0 %v444
        %v598 = vpop.f32.mrb[0].mxu0
        %v599 = vadd.f32 %v515, %v598
        %v600 = vpop.f32.mrb[0].mxu0
        %v601 = vadd.f32 %v519, %v600
        %602 = vmatprep.mubr.f32.mxu0 0.0
        %603 = vmatmul.mubr.f32.gmra.mrb[0].mxu0 %v445
        %v604 = vpop.f32.mrb[0].mxu0
        %v605 = vadd.f32 %v515, %v604
        %v606 = vpop.f32.mrb[0].mxu0
        %v607 = vadd.f32 %v519, %v606
        %608 = vdwg.mxu0
        %609 = vmatprep.subr.mxu0 %v449
        %610 = vmatpush1.msra.mxu0 %v448
        %611 = vmatprep.subr.mxu0 %v453
        %612 = vmatpush1.msra.mxu0 %v452
        %613 = vmatprep.subr.mxu0 %v457
        %614 = vmatpush1.msra.mxu0 %v456
        %615 = vmatprep.subr.mxu0 %v461
        %616 = vmatpush1.msra.mxu0 %v460
        %617 = vmatprep.subr.mxu0 %v465
        %618 = vmatpush1.msra.mxu0 %v464
        %619 = vmatprep.subr.mxu0 %v469
        %620 = vmatpush1.msra.mxu0 %v468
        %621 = vmatprep.subr.mxu0 %v473
        %622 = vmatpush1.msra.mxu0 %v472
        %623 = vmatprep.subr.mxu0 %v477
        %624 = vmatpush1.msra.mxu0 %v476
        %625 = vmatprep.subr.mxu0 %v481
        %626 = vmatpush1.msra.mxu0 %v480
        %627 = vmatprep.subr.mxu0 %v485
        %628 = vmatpush1.msra.mxu0 %v484
        %629 = vmatprep.subr.mxu0 %v489
        %630 = vmatpush1.msra.mxu0 %v488
        %631 = vmatprep.subr.mxu0 %v493
        %632 = vmatpush1.msra.mxu0 %v492
        %633 = vmatprep.subr.mxu0 %v497
        %634 = vmatpush1.msra.mxu0 %v496
        %635 = vmatprep.subr.mxu0 %v501
        %636 = vmatpush1.msra.mxu0 %v500
        %637 = vmatprep.subr.mxu0 %v505
        %638 = vmatpush1.msra.mxu0 %v504
        %639 = vmatprep.subr.mxu0 %v509
        %640 = vmatpush1.msra.mxu0 %v508
        %641 = vmatprep.subr.mxu0 0.0
        %642 = vmatpush1.msra.mxu0 0.0
        %643 = vmatprep.subr.mxu0 0.0
        %644 = vmatpush1.msra.mxu0 0.0
        %645 = vmatprep.subr.mxu0 0.0
        %646 = vmatpush1.msra.mxu0 0.0
        %647 = vmatprep.subr.mxu0 0.0
        %648 = vmatpush1.msra.mxu0 0.0
        %649 = vmatprep.subr.mxu0 0.0
        %650 = vmatpush1.msra.mxu0 0.0
        %651 = vmatprep.subr.mxu0 0.0
        %652 = vmatpush1.msra.mxu0 0.0
        %653 = vmatprep.subr.mxu0 0.0
        %654 = vmatpush1.msra.mxu0 0.0
        %655 = vmatprep.subr.mxu0 0.0
        %656 = vmatpush1.msra.mxu0 0.0
        %657 = vmatprep.subr.mxu0 0.0
        %658 = vmatpush1.msra.mxu0 0.0
        %659 = vmatprep.subr.mxu0 0.0
        %660 = vmatpush1.msra.mxu0 0.0
        %661 = vmatprep.subr.mxu0 0.0
        %662 = vmatpush1.msra.mxu0 0.0
        %663 = vmatprep.subr.mxu0 0.0
        %664 = vmatpush1.msra.mxu0 0.0
        %665 = vmatprep.subr.mxu0 0.0
        %666 = vmatpush1.msra.mxu0 0.0
        %667 = vmatprep.subr.mxu0 0.0
        %668 = vmatpush1.msra.mxu0 0.0
        %669 = vmatprep.subr.mxu0 0.0
        %670 = vmatpush1.msra.mxu0 0.0
        %671 = vmatprep.subr.mxu0 0.0
        %672 = vmatpush1.msra.mxu0 0.0
        %673 = vmatprep.mubr.f32.mxu0 0.0
        %674 = vmatmul.mubr.f32.gmra.mrb[0].mxu0 %v444
        %v675 = vpop.f32.mrb[0].mxu0
        %v676 = vadd.f32 %v523, %v675
        %v677 = vpop.f32.mrb[0].mxu0
        %v678 = vadd.f32 %v527, %v677
        %679 = vmatprep.mubr.f32.mxu0 0.0
        %680 = vmatmul.mubr.f32.gmra.mrb[0].mxu0 %v445
        %v681 = vpop.f32.mrb[0].mxu0
        %v682 = vadd.f32 %v523, %v681
        %v683 = vpop.f32.mrb[0].mxu0
        %v684 = vadd.f32 %v527, %v683
        %685 = vdwg.mxu0
        %v686 = vmax.f32 %v599, 0.0
        %v687 = vmax.f32 %v601, 0.0
        %v688 = vmax.f32 %v676, 0.0
        %v689 = vmax.f32 %v678, 0.0
        %v690 = vmax.f32 %v605, 0.0
        %v691 = vmax.f32 %v607, 0.0
        %v692 = vmax.f32 %v682, 0.0
        %v693 = vmax.f32 %v684, 0.0
        %694 = vst [vmem:[%s308] sm:$0xff] %v686
        %695 = vst [vmem:[%s308 + $0x8] sm:$0xff] %v687
        %696 = vst [vmem:[%s308 + $0x10] sm:$0xff] %v688
        %697 = vst [vmem:[%s308 + $0x18] sm:$0xff] %v689
        %698 = vst [vmem:[%s308 + $0x20] sm:$0xff] %v690
        %699 = vst [vmem:[%s308 + $0x28] sm:$0xff] %v691
        %700 = vst [vmem:[%s308 + $0x30] sm:$0xff] %v692
        %701 = vst [vmem:[%s308 + $0x38] sm:$0xff] %v693
        %s702 = sand.u32 %s165, 1
        %s703 = scalar_lea.sflag [#allocation5], %s702
        %s704 = sand.u32 %s165, 1
        %s705 = smul.addr %s704, 64
        %s706 = scalar_lea.vmem [#allocation9], %s705
        // Predicated region
        $region57: #{tpu_custom_call.1} parent=39 // pred_check
          %p707 = pneg %p175
        $region58: #{tpu_custom_call.1} parent=39 // pred_check_branch
          %709 = sbr.rel (%p707) target = $region60
        $region59: #{tpu_custom_call.1} parent=39 // pred_region
          %s710 = smul.u32 2, %s27
          %s711 = smul.u32 4, %s28
          %s713 = ssub.s32 1024, 1024
          %714 = vsyncadd %s703, %s713
          %s715 = smul.addr %s710, 4
          %s716 = sadd.s32 %s711, %s715
          %s717 = smul.addr %s716, 128
          %s718 = scalar_lea.hbm %s5, %s717
          %s719 = sshll.u32 %s706, 4
          %s720 = int_to_ptr.vmem [resolvable:$true] %s719
          %725 = dma.vmem_to_hbm [thread:$0]  %s720, 1024, %s718, %s703, 512, 512, 32
        $region60: #{tpu_custom_call.1} parent=39 // pred_fallthru
          _
      $region40: #{tpu_custom_call.1} parent=5 // pred_fallthru
        _
      %p726 = scmp.le.s32.totalorder 2, %s18
      // Predicated region
      $region61: #{tpu_custom_call.1} parent=5 // pred_check
        %p727 = pneg %p726
      $region62: #{tpu_custom_call.1} parent=5 // pred_check_branch
        %729 = sbr.rel (%p727) target = $region64
      $region63: #{tpu_custom_call.1} parent=5 // pred_region
        %s730 = ssub.s32 %s18, 2
        // Predicated region
        $region65: #{tpu_custom_call.1} parent=63 // pred_check
          %p731 = pneg %p181
        $region66: #{tpu_custom_call.1} parent=63 // pred_check_branch
          %733 = sbr.rel (%p731) target = $region68
        $region67: #{tpu_custom_call.1} parent=63 // pred_region
          %s734 = sand.u32 %s166, 1
          %s735 = scalar_lea.sflag [#allocation5], %s734
          %s736 = sand.u32 %s166, 1
          %s737 = smul.addr %s736, 64
          %s738 = scalar_lea.vmem [#allocation9], %s737
          %739 = dma.done %s735, 1024
        $region68: #{tpu_custom_call.1} parent=63 // pred_fallthru
          _
      $region64: #{tpu_custom_call.1} parent=5 // pred_fallthru
        _
    $region6: #{tpu_custom_call.1} parent=1 // loop_footer
      %s22 = sadd.s32 1, %s18
    $region7: #{tpu_custom_call.1} parent=1 // loop_footer_branch
      %17 = sbr.rel target = $region3
    $region8: #{tpu_custom_call.1} parent=1 // loop_exit
      _
    %740 = vsyncpa [#allocation4], 1
    %s741 = scalar_lea.sflag [#allocation4], 1
    %742 = vsyncpa %s741, 1
    %743 = vsyncpa [#allocation7], 1
    %744 = vsyncpa [#allocation5], 1
    %s745 = scalar_lea.sflag [#allocation5], 1
    %746 = vsyncpa %s745, 1

// kernel: tpu_custom_call.1
$region0: #{tpu_custom_call.1}
  #allocation0 [shape = 'u32[]', space=smem, size = 0x4, offset = 0x4, fixed_abs, tag = 'smem constant byte address 0x4 - core index']
  #allocation1 [shape = 'u32[144,128]{1,0:T(1,128)}', space=vmem, size = 0x12000, scoped, tag = 'internal scratch']
  #allocation2 [shape = 'f32[16,128]{1,0:T(8,128)}', space=vmem, size = 0x2000, scoped, tag = 'scratch operand']
  %s0 = inlined_call_operand.hbm [shape: f32[32,256], index: 0, kind: input, shape index: {}]
  %s1 = inlined_call_operand.hbm [shape: f32[256,128], index: 1, kind: input, shape index: {}]
  %s2 = inlined_call_operand.vmem [shape: f32[1,128], index: 2, kind: input, shape index: {}]
  %s3 = inlined_call_operand.hbm [shape: f32[128,512], index: 3, kind: input, shape index: {}]
  %s4 = inlined_call_operand.vmem [shape: f32[1,512], index: 4, kind: input, shape index: {}]
  %s5 = inlined_call_operand.hbm [shape: f32[32,512], index: 5, kind: output, shape index: {}]
  %s6 = sld [smem:[#allocation0]]
  $region69: #{tpu_custom_call.1} parent=0
    _
  %s8 = ssub.s32 1, %s6
  %s9 = scalar_select 0, %s8, %s6
  $region1: #{tpu_custom_call.1} parent=0
    #allocation3 [shape = 'u8[32768]{0}', space=vmem, size = 0x8000, scoped, tag = 'input window, operand 0']
    #allocation4 [shape = 's32[2]{0}', space=sflag, size = 0x8, scoped, tag = 'scoped memory for tpu_custom_call.1']
    #allocation5 [shape = 's32[2]{0}', space=sflag, size = 0x8, scoped, tag = 'scoped memory for tpu_custom_call.1']
    #allocation6 [shape = 'u8[131072]{0}', space=vmem, size = 0x20000, scoped, tag = 'input window, operand 1, single buffered']
    #allocation7 [shape = 's32[1]{0}', space=sflag, size = 0x4, scoped, tag = 'scoped memory for tpu_custom_call.1']
    #allocation8 [shape = 'u8[262144]{0}', space=vmem, size = 0x40000, scoped, tag = 'input window, operand 3, single buffered']
    #allocation9 [shape = 'u8[65536]{0}', space=vmem, size = 0x10000, scoped, tag = 'output window, operand 0']
    %10 = vsyncpa [#allocation4], 0
    %s11 = scalar_lea.sflag [#allocation4], 1
    %12 = vsyncpa %s11, 0
    %13 = vsyncpa [#allocation7], 0
    %14 = vsyncpa [#allocation5], 0
    %s15 = scalar_lea.sflag [#allocation5], 1
    %16 = vsyncpa %s15, 0
    loop: start=0, step=1, limit=4
    $region2: #{tpu_custom_call.1} parent=1 // loop_pre_header
      _
    $region3: #{tpu_custom_call.1} parent=1 // loop_header
      %s18 = sphi 0, %s22
      %p19 = scmp.ge.s32.totalorder %s18, 4
      %s25 = sphi 0, %s37
      %s26 = sphi 0, %s33
      %s27 = sphi 0, %s25
      %s28 = sphi 0, %s26
      %s29 = sphi 0, %s27
      %s30 = sphi 0, %s28
      %s40 = sphi 0, %s42
      %s43 = sphi 0, %s40
      %s44 = sphi 0, %s43
      %s60 = sphi 0, %s44
      %s64 = sphi 0, %s64
      %s66 = sphi 0, %s64
      %s67 = sphi 0, %s66
      %s81 = sphi 0, %s67
      %s85 = sphi 0, %s85
      %s87 = sphi 0, %s85
      %s88 = sphi 0, %s87
      %s102 = sphi 0, %s88
      %s108 = sphi 0, %s110
      %s111 = sphi 0, %s108
      %s112 = sphi 0, %s111
      %s128 = sphi 0, %s112
      %s134 = sphi 0, %s136
      %s137 = sphi 0, %s134
      %s138 = sphi 0, %s137
      %s154 = sphi 0, %s138
      %s162 = sphi 0, %s164
      %s165 = sphi 0, %s162
      %s166 = sphi 0, %s165
      %s182 = sphi 0, %s166
    $region4: #{tpu_custom_call.1} parent=1 // loop_header_branch
      %21 = sbr.rel (%p19) target = $region8
    $region5: #{tpu_custom_call.1} parent=1 // loop_body
      %s23 = ssub.s32 %s18, 1
      %s24 = ssub.s32 %s18, 2
      %s31 = sadd.s32 1, %s26
      %p32 = scmp.ge.s32.totalorder %s31, 1
      %s33 = scalar_select %p32, 0, %s31
      %s34 = sadd.s32 1, %s25
      %s35 = scalar_select %p32, %s34, %s25
      %p36 = scmp.ge.s32.totalorder %s35, 2
      %s37 = scalar_select %p36, 0, %s35
      %s38 = ssub.s32 %s25, %s37
      %p39 = scmp.eq.s32.totalorder %s38, 0
      %s41 = sadd.s32 %s40, 1
      %s42 = scalar_select %p39, %s40, %s41
      %p45 = pneg %p39
      %p46 = scmp.eq.s32.totalorder %s18, 1
      %p47 = por %p45, %p46
      %p48 = scmp.ne.s32.totalorder %s40, %s43
      %p49 = scmp.eq.s32.totalorder %s18, 0
      %p50 = por %p48, %p49
      %p51 = scmp.ne.s32.totalorder %s40, %s43
      %p52 = scmp.eq.s32.totalorder %s23, 1
      %p53 = por %p51, %p52
      %p54 = scmp.ne.s32.totalorder %s43, %s44
      %p55 = scmp.eq.s32.totalorder %s23, 0
      %p56 = por %p54, %p55
      %p57 = scmp.ne.s32.totalorder %s43, %s44
      %p58 = scmp.eq.s32.totalorder %s24, 1
      %p59 = por %p57, %p58
      %p61 = scmp.ne.s32.totalorder %s44, %s60
      %p62 = scmp.eq.s32.totalorder %s24, 0
      %p63 = por %p61, %p62
      %s65 = sadd.s32 %s64, 1
      %p68 = scmp.eq.s32.totalorder %s18, 1
      %p69 = scmp.ne.s32.totalorder %s64, %s66
      %p70 = scmp.eq.s32.totalorder %s18, 0
      %p71 = por %p69, %p70
      %p72 = scmp.ne.s32.totalorder %s64, %s66
      %p73 = scmp.eq.s32.totalorder %s23, 1
      %p74 = por %p72, %p73
      %p75 = scmp.ne.s32.totalorder %s66, %s67
      %p76 = scmp.eq.s32.totalorder %s23, 0
      %p77 = por %p75, %p76
      %p78 = scmp.ne.s32.totalorder %s66, %s67
      %p79 = scmp.eq.s32.totalorder %s24, 1
      %p80 = por %p78, %p79
      %p82 = scmp.ne.s32.totalorder %s67, %s81
      %p83 = scmp.eq.s32.totalorder %s24, 0
      %p84 = por %p82, %p83
      %s86 = sadd.s32 %s85, 1
      %p89 = scmp.eq.s32.totalorder %s18, 1
      %p90 = scmp.ne.s32.totalorder %s85, %s87
      %p91 = scmp.eq.s32.totalorder %s18, 0
      %p92 = por %p90, %p91
      %p93 = scmp.ne.s32.totalorder %s85, %s87
      %p94 = scmp.eq.s32.totalorder %s23, 1
      %p95 = por %p93, %p94
      %p96 = scmp.ne.s32.totalorder %s87, %s88
      %p97 = scmp.eq.s32.totalorder %s23, 0
      %p98 = por %p96, %p97
      %p99 = scmp.ne.s32.totalorder %s87, %s88
      %p100 = scmp.eq.s32.totalorder %s24, 1
      %p101 = por %p99, %p100
      %p103 = scmp.ne.s32.totalorder %s88, %s102
      %p104 = scmp.eq.s32.totalorder %s24, 0
      %p105 = por %p103, %p104
      %s106 = ssub.s32 %s26, %s33
      %p107 = scmp.eq.s32.totalorder %s106, 0
      %s109 = sadd.s32 %s108, 1
      %s110 = scalar_select %p107, %s108, %s109
      %p113 = pneg %p107
      %p114 = scmp.eq.s32.totalorder %s18, 1
      %p115 = por %p113, %p114
      %p116 = scmp.ne.s32.totalorder %s108, %s111
      %p117 = scmp.eq.s32.totalorder %s18, 0
      %p118 = por %p116, %p117
      %p119 = scmp.ne.s32.totalorder %s108, %s111
      %p120 = scmp.eq.s32.totalorder %s23, 1
      %p121 = por %p119, %p120
      %p122 = scmp.ne.s32.totalorder %s111, %s112
      %p123 = scmp.eq.s32.totalorder %s23, 0
      %p124 = por %p122, %p123
      %p125 = scmp.ne.s32.totalorder %s111, %s112
      %p126 = scmp.eq.s32.totalorder %s24, 1
      %p127 = por %p125, %p126
      %p129 = scmp.ne.s32.totalorder %s112, %s128
      %p130 = scmp.eq.s32.totalorder %s24, 0
      %p131 = por %p129, %p130
      %s132 = ssub.s32 %s26, %s33
      %p133 = scmp.eq.s32.totalorder %s132, 0
      %s135 = sadd.s32 %s134, 1
      %s136 = scalar_select %p133, %s134, %s135
      %p139 = pneg %p133
      %p140 = scmp.eq.s32.totalorder %s18, 1
      %p141 = por %p139, %p140
      %p142 = scmp.ne.s32.totalorder %s134, %s137
      %p143 = scmp.eq.s32.totalorder %s18, 0
      %p144 = por %p142, %p143
      %p145 = scmp.ne.s32.totalorder %s134, %s137
      %p146 = scmp.eq.s32.totalorder %s23, 1
      %p147 = por %p145, %p146
      %p148 = scmp.ne.s32.totalorder %s137, %s138
      %p149 = scmp.eq.s32.totalorder %s23, 0
      %p150 = por %p148, %p149
      %p151 = scmp.ne.s32.totalorder %s137, %s138
      %p152 = scmp.eq.s32.totalorder %s24, 1
      %p153 = por %p151, %p152
      %p155 = scmp.ne.s32.totalorder %s138, %s154
      %p156 = scmp.eq.s32.totalorder %s24, 0
      %p157 = por %p155, %p156
      %s158 = ssub.s32 %s25, %s37
      %s159 = ssub.s32 %s26, %s33
      %s160 = sor.u32 %s158, %s159
      %p161 = scmp.eq.s32.totalorder %s160, 0
      %s163 = sadd.s32 %s162, 1
      %s164 = scalar_select %p161, %s162, %s163
      %p167 = pneg %p161
      %p168 = scmp.eq.s32.totalorder %s18, 1
      %p169 = por %p167, %p168
      %p170 = scmp.ne.s32.totalorder %s162, %s165
      %p171 = scmp.eq.s32.totalorder %s18, 0
      %p172 = por %p170, %p171
      %p173 = scmp.ne.s32.totalorder %s162, %s165
      %p174 = scmp.eq.s32.totalorder %s23, 1
      %p175 = por %p173, %p174
      %p176 = scmp.ne.s32.totalorder %s165, %s166
      %p177 = scmp.eq.s32.totalorder %s23, 0
      %p178 = por %p176, %p177
      %p179 = scmp.ne.s32.totalorder %s165, %s166
      %p180 = scmp.eq.s32.totalorder %s24, 1
      %p181 = por %p179, %p180
      %p183 = scmp.ne.s32.totalorder %s166, %s182
      %p184 = scmp.eq.s32.totalorder %s24, 0
      %p185 = por %p183, %p184
      %p186 = scmp.le.s32.totalorder 1, %s18
      %p187 = scmp.lt.s32.totalorder %s18, 3
      %p188 = pnand %p186, %p187
      %p189 = pneg %p188
      // Predicated region
      $region9: #{tpu_custom_call.1} parent=5 // pred_check
        _
      $region10: #{tpu_custom_call.1} parent=5 // pred_check_branch
        %191 = sbr.rel (%p188) target = $region12
      $region11: #{tpu_custom_call.1} parent=5 // pred_region
        %s192 = ssub.s32 %s18, 1
        // Predicated region
        $region13: #{tpu_custom_call.1} parent=11 // pred_check
          %p193 = pneg %p77
        $region14: #{tpu_custom_call.1} parent=11 // pred_check_branch
          %195 = sbr.rel (%p193) target = $region16
        $region15: #{tpu_custom_call.1} parent=11 // pred_region
          %s197 = ssub.s32 4096, 4096
          %198 = vsyncadd [#allocation7], %s197
          %s199 = sshll.u32 [#allocation6], 4
          %s200 = int_to_ptr.vmem [resolvable:$true] %s199
          %205 = dma.hbm_to_vmem [thread:$0]  %s1, 4096, %s200, [#allocation7], 128, 128, 8
        $region16: #{tpu_custom_call.1} parent=11 // pred_fallthru
          _
        // Predicated region
        $region17: #{tpu_custom_call.1} parent=11 // pred_check
          %p206 = pneg %p98
        $region18: #{tpu_custom_call.1} parent=11 // pred_check_branch
          %208 = sbr.rel (%p206) target = $region20
        $region19: #{tpu_custom_call.1} parent=11 // pred_region
          _
        $region20: #{tpu_custom_call.1} parent=11 // pred_fallthru
          _
        // Predicated region
        $region21: #{tpu_custom_call.1} parent=11 // pred_check
          %p209 = pneg %p124
        $region22: #{tpu_custom_call.1} parent=11 // pred_check_branch
          %211 = sbr.rel (%p209) target = $region24
        $region23: #{tpu_custom_call.1} parent=11 // pred_region
          %s212 = smul.u32 4, %s28
          %s214 = ssub.s32 8192, 8192
          %215 = vsyncadd [#allocation7], %s214
          %s216 = smul.addr %s212, 128
          %s217 = scalar_lea.hbm %s3, %s216
          %s218 = sshll.u32 [#allocation8], 4
          %s219 = int_to_ptr.vmem [resolvable:$true] %s218
          %224 = dma.hbm_to_vmem [thread:$0]  %s217, 8192, %s219, [#allocation7], 512, 512, 32
        $region24: #{tpu_custom_call.1} parent=11 // pred_fallthru
          _
        // Predicated region
        $region25: #{tpu_custom_call.1} parent=11 // pred_check
          %p225 = pneg %p150
        $region26: #{tpu_custom_call.1} parent=11 // pred_check_branch
          %227 = sbr.rel (%p225) target = $region28
        $region27: #{tpu_custom_call.1} parent=11 // pred_region
          %s228 = smul.u32 4, %s28
          %p229 = scmp.lt.s32.totalorder %s228, 3
          %s230 = scalar_select %p229, %s228, 3
          %s231 = scalar_lea.vmem %s4, %s230
          %s232 = smul.u32 4, %s28
        $region28: #{tpu_custom_call.1} parent=11 // pred_fallthru
          _
      $region12: #{tpu_custom_call.1} parent=5 // pred_fallthru
        _
      %p233 = scmp.lt.s32.totalorder %s18, 2
      // Predicated region
      $region29: #{tpu_custom_call.1} parent=5 // pred_check
        %p234 = pneg %p233
      $region30: #{tpu_custom_call.1} parent=5 // pred_check_branch
        %236 = sbr.rel (%p234) target = $region32
      $region31: #{tpu_custom_call.1} parent=5 // pred_region
        // Predicated region
        $region33: #{tpu_custom_call.1} parent=31 // pred_check
          %p237 = pneg %p50
        $region34: #{tpu_custom_call.1} parent=31 // pred_check_branch
          %239 = sbr.rel (%p237) target = $region36
        $region35: #{tpu_custom_call.1} parent=31 // pred_region
          %s240 = sand.u32 %s40, 1
          %s241 = scalar_lea.sflag [#allocation4], %s240
          %s242 = sand.u32 %s40, 1
          %s243 = smul.addr %s242, 32
          %s244 = scalar_lea.vmem [#allocation3], %s243
          %s245 = smul.u32 2, %s25
          %s247 = ssub.s32 512, 512
          %248 = vsyncadd %s241, %s247
          %s249 = smul.addr %s245, 2
          %s250 = smul.addr %s249, 128
          %s251 = scalar_lea.hbm %s0, %s250
          %s252 = sshll.u32 %s244, 4
          %s253 = int_to_ptr.vmem [resolvable:$true] %s252
          %258 = dma.hbm_to_vmem [thread:$0]  %s251, 512, %s253, %s241, 256, 256, 16
        $region36: #{tpu_custom_call.1} parent=31 // pred_fallthru
          _
      $region32: #{tpu_custom_call.1} parent=5 // pred_fallthru
        _
      %p259 = scmp.le.s32.totalorder 1, %s18
      %p260 = scmp.lt.s32.totalorder %s18, 3
      %p261 = pnand %p259, %p260
      %p262 = pneg %p261
      // Predicated region
      $region37: #{tpu_custom_call.1} parent=5 // pred_check
        _
      $region38: #{tpu_custom_call.1} parent=5 // pred_check_branch
        %264 = sbr.rel (%p261) target = $region40
      $region39: #{tpu_custom_call.1} parent=5 // pred_region
        %s265 = ssub.s32 %s18, 1
        %s266 = sand.u32 %s43, 1
        %s267 = scalar_lea.sflag [#allocation4], %s266
        %s268 = sand.u32 %s43, 1
        %s269 = smul.addr %s268, 32
        %s270 = scalar_lea.vmem [#allocation3], %s269
        // Predicated region
        $region41: #{tpu_custom_call.1} parent=39 // pred_check
          %p271 = pneg %p56
        $region42: #{tpu_custom_call.1} parent=39 // pred_check_branch
          %273 = sbr.rel (%p271) target = $region44
        $region43: #{tpu_custom_call.1} parent=39 // pred_region
          %274 = dma.done %s267, 512
        $region44: #{tpu_custom_call.1} parent=39 // pred_fallthru
          _
        // Predicated region
        $region45: #{tpu_custom_call.1} parent=39 // pred_check
          %p275 = pneg %p77
        $region46: #{tpu_custom_call.1} parent=39 // pred_check_branch
          %277 = sbr.rel (%p275) target = $region48
        $region47: #{tpu_custom_call.1} parent=39 // pred_region
          %278 = dma.done [#allocation7], 4096
        $region48: #{tpu_custom_call.1} parent=39 // pred_fallthru
          _
        // Predicated region
        $region49: #{tpu_custom_call.1} parent=39 // pred_check
          %p279 = pneg %p124
        $region50: #{tpu_custom_call.1} parent=39 // pred_check_branch
          %281 = sbr.rel (%p279) target = $region52
        $region51: #{tpu_custom_call.1} parent=39 // pred_region
          %282 = dma.done [#allocation7], 8192
        $region52: #{tpu_custom_call.1} parent=39 // pred_fallthru
          _
        %s283 = sand.u32 %s43, 1
        %s284 = scalar_lea.sflag [#allocation4], %s283
        %s285 = sand.u32 %s43, 1
        %s286 = smul.addr %s285, 32
        %s287 = scalar_lea.vmem [#allocation3], %s286
        %p288 = pneg %p56
        %p289 = pneg %p53
        %p290 = pneg %p77
        %p291 = pneg %p74
        %p292 = pneg %p98
        %p293 = pneg %p95
        %p294 = pneg %p124
        %p295 = pneg %p121
        %s296 = smul.u32 4, %s28
        %p297 = scmp.lt.s32.totalorder %s296, 3
        %s298 = scalar_select %p297, %s296, 3
        %s299 = scalar_lea.vmem %s4, %s298
        %p300 = pneg %p150
        %p301 = pneg %p147
        %p302 = pneg %p178
        %p303 = pneg %p175
        %s304 = sand.u32 %s165, 1
        %s305 = scalar_lea.sflag [#allocation5], %s304
        %s306 = sand.u32 %s165, 1
        %s307 = smul.addr %s306, 64
        %s308 = scalar_lea.vmem [#allocation9], %s307
        %s309 = smul.u32 2, %s27
        %s310 = smul.u32 4, %s28
        %s311 = smul.u32 4, %s28
        %p312 = scmp.lt.s32.totalorder %s311, 3
        %s313 = scalar_select %p312, %s311, 3
        %s314 = scalar_lea.vmem %s4, %s313
        %s315 = smul.u32 4, %s28
        %s316 = smul.u32 2, %s27
        %s317 = smul.u32 4, %s28
        %p318 = scmp.eq.s32.totalorder %s28, 0
        // Predicated region
        $region53: #{tpu_custom_call.1} parent=39 // pred_check
          %p319 = pneg %p318
        $region54: #{tpu_custom_call.1} parent=39 // pred_check_branch
          %321 = sbr.rel (%p319) target = $region56
        $region55: #{tpu_custom_call.1} parent=39 // pred_region
          %v322 = vld [vmem:[%s270] sm:$0xff]
          %v323 = vld [vmem:[%s270 + $0x8] sm:$0xff]
          %v324 = vld [vmem:[%s270 + $0x10] sm:$0xff]
          %v325 = vld [vmem:[%s270 + $0x18] sm:$0xff]
          %v326 = vld [vmem:[#allocation6] sm:$0xff]
          %v327 = vld [vmem:[#allocation6 + $0x8] sm:$0xff]
          %v328 = vld [vmem:[#allocation6 + $0x10] sm:$0xff]
          %v329 = vld [vmem:[#allocation6 + $0x18] sm:$0xff]
          %v330 = vld [vmem:[#allocation6 + $0x20] sm:$0xff]
          %v331 = vld [vmem:[#allocation6 + $0x28] sm:$0xff]
          %v332 = vld [vmem:[#allocation6 + $0x30] sm:$0xff]
          %v333 = vld [vmem:[#allocation6 + $0x38] sm:$0xff]
          %v334 = vld [vmem:[#allocation6 + $0x40] sm:$0xff]
          %v335 = vld [vmem:[#allocation6 + $0x48] sm:$0xff]
          %v336 = vld [vmem:[#allocation6 + $0x50] sm:$0xff]
          %v337 = vld [vmem:[#allocation6 + $0x58] sm:$0xff]
          %v338 = vld [vmem:[#allocation6 + $0x60] sm:$0xff]
          %v339 = vld [vmem:[#allocation6 + $0x68] sm:$0xff]
          %v340 = vld [vmem:[#allocation6 + $0x70] sm:$0xff]
          %v341 = vld [vmem:[#allocation6 + $0x78] sm:$0xff]
          %v342 = vld [vmem:[#allocation6 + $0x80] sm:$0xff]
          %v343 = vld [vmem:[#allocation6 + $0x88] sm:$0xff]
          %v344 = vld [vmem:[#allocation6 + $0x90] sm:$0xff]
          %v345 = vld [vmem:[#allocation6 + $0x98] sm:$0xff]
          %v346 = vld [vmem:[#allocation6 + $0xa0] sm:$0xff]
          %v347 = vld [vmem:[#allocation6 + $0xa8] sm:$0xff]
          %v348 = vld [vmem:[#allocation6 + $0xb0] sm:$0xff]
          %v349 = vld [vmem:[#allocation6 + $0xb8] sm:$0xff]
          %v350 = vld [vmem:[#allocation6 + $0xc0] sm:$0xff]
          %v351 = vld [vmem:[#allocation6 + $0xc8] sm:$0xff]
          %v352 = vld [vmem:[#allocation6 + $0xd0] sm:$0xff]
          %v353 = vld [vmem:[#allocation6 + $0xd8] sm:$0xff]
          %v354 = vld [vmem:[#allocation6 + $0xe0] sm:$0xff]
          %v355 = vld [vmem:[#allocation6 + $0xe8] sm:$0xff]
          %v356 = vld [vmem:[#allocation6 + $0xf0] sm:$0xff]
          %v357 = vld [vmem:[#allocation6 + $0xf8] sm:$0xff]
          %v358 = vld [vmem:[%s2] sm:$0x1]
          %v360 = vlaneseq
          %v361 = vshrl.u32 %v360, 7
          %v362 = vsub.s32 0, %v361
          %v363 = vrot.slane %v358, %v362
          %365 = vmatprep.subr.mxu0 0.0
          %366 = vmatpush1.msra.mxu0 %v326
          %367 = vmatprep.subr.mxu0 0.0
          %368 = vmatpush1.msra.mxu0 %v327
          %369 = vmatprep.subr.mxu0 0.0
          %370 = vmatpush1.msra.mxu0 %v328
          %371 = vmatprep.subr.mxu0 0.0
          %372 = vmatpush1.msra.mxu0 %v329
          %373 = vmatprep.subr.mxu0 0.0
          %374 = vmatpush1.msra.mxu0 %v330
          %375 = vmatprep.subr.mxu0 0.0
          %376 = vmatpush1.msra.mxu0 %v331
          %377 = vmatprep.subr.mxu0 0.0
          %378 = vmatpush1.msra.mxu0 %v332
          %379 = vmatprep.subr.mxu0 0.0
          %380 = vmatpush1.msra.mxu0 %v333
          %381 = vmatprep.subr.mxu0 0.0
          %382 = vmatpush1.msra.mxu0 %v334
          %383 = vmatprep.subr.mxu0 0.0
          %384 = vmatpush1.msra.mxu0 %v335
          %385 = vmatprep.subr.mxu0 0.0
          %386 = vmatpush1.msra.mxu0 %v336
          %387 = vmatprep.subr.mxu0 0.0
          %388 = vmatpush1.msra.mxu0 %v337
          %389 = vmatprep.subr.mxu0 0.0
          %390 = vmatpush1.msra.mxu0 %v338
          %391 = vmatprep.subr.mxu0 0.0
          %392 = vmatpush1.msra.mxu0 %v339
          %393 = vmatprep.subr.mxu0 0.0
          %394 = vmatpush1.msra.mxu0 %v340
          %395 = vmatprep.subr.mxu0 0.0
          %396 = vmatpush1.msra.mxu0 %v341
          %397 = vmatprep.subr.mxu0 0.0
          %398 = vmatpush1.msra.mxu0 %v342
          %399 = vmatprep.subr.mxu0 0.0
          %400 = vmatpush1.msra.mxu0 %v343
          %401 = vmatprep.subr.mxu0 0.0
          %402 = vmatpush1.msra.mxu0 %v344
          %403 = vmatprep.subr.mxu0 0.0
          %404 = vmatpush1.msra.mxu0 %v345
          %405 = vmatprep.subr.mxu0 0.0
          %406 = vmatpush1.msra.mxu0 %v346
          %407 = vmatprep.subr.mxu0 0.0
          %408 = vmatpush1.msra.mxu0 %v347
          %409 = vmatprep.subr.mxu0 0.0
          %410 = vmatpush1.msra.mxu0 %v348
          %411 = vmatprep.subr.mxu0 0.0
          %412 = vmatpush1.msra.mxu0 %v349
          %413 = vmatprep.subr.mxu0 0.0
          %414 = vmatpush1.msra.mxu0 %v350
          %415 = vmatprep.subr.mxu0 0.0
          %416 = vmatpush1.msra.mxu0 %v351
          %417 = vmatprep.subr.mxu0 0.0
          %418 = vmatpush1.msra.mxu0 %v352
          %419 = vmatprep.subr.mxu0 0.0
          %420 = vmatpush1.msra.mxu0 %v353
          %421 = vmatprep.subr.mxu0 0.0
          %422 = vmatpush1.msra.mxu0 %v354
          %423 = vmatprep.subr.mxu0 0.0
          %424 = vmatpush1.msra.mxu0 %v355
          %425 = vmatprep.subr.mxu0 0.0
          %426 = vmatpush1.msra.mxu0 %v356
          %427 = vmatprep.subr.mxu0 0.0
          %428 = vmatpush1.msra.mxu0 %v357
          %429 = vmatprep.mubr.f32.mxu0 %v323
          %430 = vmatmul.mubr.f32.gmra.mrb[0].mxu0 %v322
          %v431 = vpop.f32.mrb[0].mxu0
          %v432 = vadd.f32 %v363, %v431
          %v433 = vpop.f32.mrb[0].mxu0
          %434 = vmatprep.mubr.f32.mxu0 %v325
          %435 = vmatmul.mubr.f32.gmra.mrb[0].mxu0 %v324
          %v436 = vpop.f32.mrb[0].mxu0
          %v437 = vadd.f32 %v363, %v436
          %v438 = vpop.f32.mrb[0].mxu0
          %439 = vdwg.mxu0
          %v440 = vmax.f32 %v432, 0.0
          %v441 = vmax.f32 %v437, 0.0
          %442 = vst [vmem:[#allocation2] sm:$0xff] %v440
          %443 = vst [vmem:[#allocation2 + $0x8] sm:$0xff] %v441
        $region56: #{tpu_custom_call.1} parent=39 // pred_fallthru
          _
        %v444 = vld [vmem:[#allocation2] sm:$0xff]
        %v445 = vld [vmem:[#allocation2 + $0x8] sm:$0xff]
        %v446 = vld [vmem:[#allocation8] sm:$0xff]
        %v447 = vld [vmem:[#allocation8 + $0x8] sm:$0xff]
        %v448 = vld [vmem:[#allocation8 + $0x10] sm:$0xff]
        %v449 = vld [vmem:[#allocation8 + $0x18] sm:$0xff]
        %v450 = vld [vmem:[#allocation8 + $0x20] sm:$0xff]
        %v451 = vld [vmem:[#allocation8 + $0x28] sm:$0xff]
        %v452 = vld [vmem:[#allocation8 + $0x30] sm:$0xff]
        %v453 = vld [vmem:[#allocation8 + $0x38] sm:$0xff]
        %v454 = vld [vmem:[#allocation8 + $0x40] sm:$0xff]
        %v455 = vld [vmem:[#allocation8 + $0x48] sm:$0xff]
        %v456 = vld [vmem:[#allocation8 + $0x50] sm:$0xff]
        %v457 = vld [vmem:[#allocation8 + $0x58] sm:$0xff]
        %v458 = vld [vmem:[#allocation8 + $0x60] sm:$0xff]
        %v459 = vld [vmem:[#allocation8 + $0x68] sm:$0xff]
        %v460 = vld [vmem:[#allocation8 + $0x70] sm:$0xff]
        %v461 = vld [vmem:[#allocation8 + $0x78] sm:$0xff]
        %v462 = vld [vmem:[#allocation8 + $0x80] sm:$0xff]
        %v463 = vld [vmem:[#allocation8 + $0x88] sm:$0xff]
        %v464 = vld [vmem:[#allocation8 + $0x90] sm:$0xff]
        %v465 = vld [vmem:[#allocation8 + $0x98] sm:$0xff]
        %v466 = vld [vmem:[#allocation8 + $0xa0] sm:$0xff]
        %v467 = vld [vmem:[#allocation8 + $0xa8] sm:$0xff]
        %v468 = vld [vmem:[#allocation8 + $0xb0] sm:$0xff]
        %v469 = vld [vmem:[#allocation8 + $0xb8] sm:$0xff]
        %v470 = vld [vmem:[#allocation8 + $0xc0] sm:$0xff]
        %v471 = vld [vmem:[#allocation8 + $0xc8] sm:$0xff]
        %v472 = vld [vmem:[#allocation8 + $0xd0] sm:$0xff]
        %v473 = vld [vmem:[#allocation8 + $0xd8] sm:$0xff]
        %v474 = vld [vmem:[#allocation8 + $0xe0] sm:$0xff]
        %v475 = vld [vmem:[#allocation8 + $0xe8] sm:$0xff]
        %v476 = vld [vmem:[#allocation8 + $0xf0] sm:$0xff]
        %v477 = vld [vmem:[#allocation8 + $0xf8] sm:$0xff]
        %v478 = vld [vmem:[#allocation8 + $0x100] sm:$0xff]
        %v479 = vld [vmem:[#allocation8 + $0x108] sm:$0xff]
        %v480 = vld [vmem:[#allocation8 + $0x110] sm:$0xff]
        %v481 = vld [vmem:[#allocation8 + $0x118] sm:$0xff]
        %v482 = vld [vmem:[#allocation8 + $0x120] sm:$0xff]
        %v483 = vld [vmem:[#allocation8 + $0x128] sm:$0xff]
        %v484 = vld [vmem:[#allocation8 + $0x130] sm:$0xff]
        %v485 = vld [vmem:[#allocation8 + $0x138] sm:$0xff]
        %v486 = vld [vmem:[#allocation8 + $0x140] sm:$0xff]
        %v487 = vld [vmem:[#allocation8 + $0x148] sm:$0xff]
        %v488 = vld [vmem:[#allocation8 + $0x150] sm:$0xff]
        %v489 = vld [vmem:[#allocation8 + $0x158] sm:$0xff]
        %v490 = vld [vmem:[#allocation8 + $0x160] sm:$0xff]
        %v491 = vld [vmem:[#allocation8 + $0x168] sm:$0xff]
        %v492 = vld [vmem:[#allocation8 + $0x170] sm:$0xff]
        %v493 = vld [vmem:[#allocation8 + $0x178] sm:$0xff]
        %v494 = vld [vmem:[#allocation8 + $0x180] sm:$0xff]
        %v495 = vld [vmem:[#allocation8 + $0x188] sm:$0xff]
        %v496 = vld [vmem:[#allocation8 + $0x190] sm:$0xff]
        %v497 = vld [vmem:[#allocation8 + $0x198] sm:$0xff]
        %v498 = vld [vmem:[#allocation8 + $0x1a0] sm:$0xff]
        %v499 = vld [vmem:[#allocation8 + $0x1a8] sm:$0xff]
        %v500 = vld [vmem:[#allocation8 + $0x1b0] sm:$0xff]
        %v501 = vld [vmem:[#allocation8 + $0x1b8] sm:$0xff]
        %v502 = vld [vmem:[#allocation8 + $0x1c0] sm:$0xff]
        %v503 = vld [vmem:[#allocation8 + $0x1c8] sm:$0xff]
        %v504 = vld [vmem:[#allocation8 + $0x1d0] sm:$0xff]
        %v505 = vld [vmem:[#allocation8 + $0x1d8] sm:$0xff]
        %v506 = vld [vmem:[#allocation8 + $0x1e0] sm:$0xff]
        %v507 = vld [vmem:[#allocation8 + $0x1e8] sm:$0xff]
        %v508 = vld [vmem:[#allocation8 + $0x1f0] sm:$0xff]
        %v509 = vld [vmem:[#allocation8 + $0x1f8] sm:$0xff]
        %v510 = vld [vmem:[%s314] sm:$0xf]
        %v512 = vlaneseq
        %v513 = vshrl.u32 %v512, 7
        %v514 = vsub.s32 0, %v513
        %v515 = vrot.slane %v510, %v514
        %v516 = vlaneseq
        %v517 = vshrl.u32 %v516, 7
        %v518 = vsub.s32 1, %v517
        %v519 = vrot.slane %v510, %v518
        %v520 = vlaneseq
        %v521 = vshrl.u32 %v520, 7
        %v522 = vsub.s32 2, %v521
        %v523 = vrot.slane %v510, %v522
        %v524 = vlaneseq
        %v525 = vshrl.u32 %v524, 7
        %v526 = vsub.s32 3, %v525
        %v527 = vrot.slane %v510, %v526
        %532 = vmatprep.subr.mxu0 %v447
        %533 = vmatpush1.msra.mxu0 %v446
        %534 = vmatprep.subr.mxu0 %v451
        %535 = vmatpush1.msra.mxu0 %v450
        %536 = vmatprep.subr.mxu0 %v455
        %537 = vmatpush1.msra.mxu0 %v454
        %538 = vmatprep.subr.mxu0 %v459
        %539 = vmatpush1.msra.mxu0 %v458
        %540 = vmatprep.subr.mxu0 %v463
        %541 = vmatpush1.msra.mxu0 %v462
        %542 = vmatprep.subr.mxu0 %v467
        %543 = vmatpush1.msra.mxu0 %v466
        %544 = vmatprep.subr.mxu0 %v471
        %545 = vmatpush1.msra.mxu0 %v470
        %546 = vmatprep.subr.mxu0 %v475
        %547 = vmatpush1.msra.mxu0 %v474
        %548 = vmatprep.subr.mxu0 %v479
        %549 = vmatpush1.msra.mxu0 %v478
        %550 = vmatprep.subr.mxu0 %v483
        %551 = vmatpush1.msra.mxu0 %v482
        %552 = vmatprep.subr.mxu0 %v487
        %553 = vmatpush1.msra.mxu0 %v486
        %554 = vmatprep.subr.mxu0 %v491
        %555 = vmatpush1.msra.mxu0 %v490
        %556 = vmatprep.subr.mxu0 %v495
        %557 = vmatpush1.msra.mxu0 %v494
        %558 = vmatprep.subr.mxu0 %v499
        %559 = vmatpush1.msra.mxu0 %v498
        %560 = vmatprep.subr.mxu0 %v503
        %561 = vmatpush1.msra.mxu0 %v502
        %562 = vmatprep.subr.mxu0 %v507
        %563 = vmatpush1.msra.mxu0 %v506
        %564 = vmatprep.subr.mxu0 0.0
        %565 = vmatpush1.msra.mxu0 0.0
        %566 = vmatprep.subr.mxu0 0.0
        %567 = vmatpush1.msra.mxu0 0.0
        %568 = vmatprep.subr.mxu0 0.0
        %569 = vmatpush1.msra.mxu0 0.0
        %570 = vmatprep.subr.mxu0 0.0
        %571 = vmatpush1.msra.mxu0 0.0
        %572 = vmatprep.subr.mxu0 0.0
        %573 = vmatpush1.msra.mxu0 0.0
        %574 = vmatprep.subr.mxu0 0.0
        %575 = vmatpush1.msra.mxu0 0.0
        %576 = vmatprep.subr.mxu0 0.0
        %577 = vmatpush1.msra.mxu0 0.0
        %578 = vmatprep.subr.mxu0 0.0
        %579 = vmatpush1.msra.mxu0 0.0
        %580 = vmatprep.subr.mxu0 0.0
        %581 = vmatpush1.msra.mxu0 0.0
        %582 = vmatprep.subr.mxu0 0.0
        %583 = vmatpush1.msra.mxu0 0.0
        %584 = vmatprep.subr.mxu0 0.0
        %585 = vmatpush1.msra.mxu0 0.0
        %586 = vmatprep.subr.mxu0 0.0
        %587 = vmatpush1.msra.mxu0 0.0
        %588 = vmatprep.subr.mxu0 0.0
        %589 = vmatpush1.msra.mxu0 0.0
        %590 = vmatprep.subr.mxu0 0.0
        %591 = vmatpush1.msra.mxu0 0.0
        %592 = vmatprep.subr.mxu0 0.0
        %593 = vmatpush1.msra.mxu0 0.0
        %594 = vmatprep.subr.mxu0 0.0
        %595 = vmatpush1.msra.mxu0 0.0
        %596 = vmatprep.mubr.f32.mxu0 0.0
        %597 = vmatmul.mubr.f32.gmra.mrb[0].mxu0 %v444
        %v598 = vpop.f32.mrb[0].mxu0
        %v599 = vadd.f32 %v515, %v598
        %v600 = vpop.f32.mrb[0].mxu0
        %v601 = vadd.f32 %v519, %v600
        %602 = vmatprep.mubr.f32.mxu0 0.0
        %603 = vmatmul.mubr.f32.gmra.mrb[0].mxu0 %v445
        %v604 = vpop.f32.mrb[0].mxu0
        %v605 = vadd.f32 %v515, %v604
        %v606 = vpop.f32.mrb[0].mxu0
        %v607 = vadd.f32 %v519, %v606
        %608 = vdwg.mxu0
        %609 = vmatprep.subr.mxu0 %v449
        %610 = vmatpush1.msra.mxu0 %v448
        %611 = vmatprep.subr.mxu0 %v453
        %612 = vmatpush1.msra.mxu0 %v452
        %613 = vmatprep.subr.mxu0 %v457
        %614 = vmatpush1.msra.mxu0 %v456
        %615 = vmatprep.subr.mxu0 %v461
        %616 = vmatpush1.msra.mxu0 %v460
        %617 = vmatprep.subr.mxu0 %v465
        %618 = vmatpush1.msra.mxu0 %v464
        %619 = vmatprep.subr.mxu0 %v469
        %620 = vmatpush1.msra.mxu0 %v468
        %621 = vmatprep.subr.mxu0 %v473
        %622 = vmatpush1.msra.mxu0 %v472
        %623 = vmatprep.subr.mxu0 %v477
        %624 = vmatpush1.msra.mxu0 %v476
        %625 = vmatprep.subr.mxu0 %v481
        %626 = vmatpush1.msra.mxu0 %v480
        %627 = vmatprep.subr.mxu0 %v485
        %628 = vmatpush1.msra.mxu0 %v484
        %629 = vmatprep.subr.mxu0 %v489
        %630 = vmatpush1.msra.mxu0 %v488
        %631 = vmatprep.subr.mxu0 %v493
        %632 = vmatpush1.msra.mxu0 %v492
        %633 = vmatprep.subr.mxu0 %v497
        %634 = vmatpush1.msra.mxu0 %v496
        %635 = vmatprep.subr.mxu0 %v501
        %636 = vmatpush1.msra.mxu0 %v500
        %637 = vmatprep.subr.mxu0 %v505
        %638 = vmatpush1.msra.mxu0 %v504
        %639 = vmatprep.subr.mxu0 %v509
        %640 = vmatpush1.msra.mxu0 %v508
        %641 = vmatprep.subr.mxu0 0.0
        %642 = vmatpush1.msra.mxu0 0.0
        %643 = vmatprep.subr.mxu0 0.0
        %644 = vmatpush1.msra.mxu0 0.0
        %645 = vmatprep.subr.mxu0 0.0
        %646 = vmatpush1.msra.mxu0 0.0
        %647 = vmatprep.subr.mxu0 0.0
        %648 = vmatpush1.msra.mxu0 0.0
        %649 = vmatprep.subr.mxu0 0.0
        %650 = vmatpush1.msra.mxu0 0.0
        %651 = vmatprep.subr.mxu0 0.0
        %652 = vmatpush1.msra.mxu0 0.0
        %653 = vmatprep.subr.mxu0 0.0
        %654 = vmatpush1.msra.mxu0 0.0
        %655 = vmatprep.subr.mxu0 0.0
        %656 = vmatpush1.msra.mxu0 0.0
        %657 = vmatprep.subr.mxu0 0.0
        %658 = vmatpush1.msra.mxu0 0.0
        %659 = vmatprep.subr.mxu0 0.0
        %660 = vmatpush1.msra.mxu0 0.0
        %661 = vmatprep.subr.mxu0 0.0
        %662 = vmatpush1.msra.mxu0 0.0
        %663 = vmatprep.subr.mxu0 0.0
        %664 = vmatpush1.msra.mxu0 0.0
        %665 = vmatprep.subr.mxu0 0.0
        %666 = vmatpush1.msra.mxu0 0.0
        %667 = vmatprep.subr.mxu0 0.0
        %668 = vmatpush1.msra.mxu0 0.0
        %669 = vmatprep.subr.mxu0 0.0
        %670 = vmatpush1.msra.mxu0 0.0
        %671 = vmatprep.subr.mxu0 0.0
        %672 = vmatpush1.msra.mxu0 0.0
        %673 = vmatprep.mubr.f32.mxu0 0.0
        %674 = vmatmul.mubr.f32.gmra.mrb[0].mxu0 %v444
        %v675 = vpop.f32.mrb[0].mxu0
        %v676 = vadd.f32 %v523, %v675
        %v677 = vpop.f32.mrb[0].mxu0
        %v678 = vadd.f32 %v527, %v677
        %679 = vmatprep.mubr.f32.mxu0 0.0
        %680 = vmatmul.mubr.f32.gmra.mrb[0].mxu0 %v445
        %v681 = vpop.f32.mrb[0].mxu0
        %v682 = vadd.f32 %v523, %v681
        %v683 = vpop.f32.mrb[0].mxu0
        %v684 = vadd.f32 %v527, %v683
        %685 = vdwg.mxu0
        %v686 = vmax.f32 %v599, 0.0
        %v687 = vmax.f32 %v601, 0.0
        %v688 = vmax.f32 %v676, 0.0
        %v689 = vmax.f32 %v678, 0.0
        %v690 = vmax.f32 %v605, 0.0
        %v691 = vmax.f32 %v607, 0.0
        %v692 = vmax.f32 %v682, 0.0
        %v693 = vmax.f32 %v684, 0.0
        %694 = vst [vmem:[%s308] sm:$0xff] %v686
        %695 = vst [vmem:[%s308 + $0x8] sm:$0xff] %v687
        %696 = vst [vmem:[%s308 + $0x10] sm:$0xff] %v688
        %697 = vst [vmem:[%s308 + $0x18] sm:$0xff] %v689
        %698 = vst [vmem:[%s308 + $0x20] sm:$0xff] %v690
        %699 = vst [vmem:[%s308 + $0x28] sm:$0xff] %v691
        %700 = vst [vmem:[%s308 + $0x30] sm:$0xff] %v692
        %701 = vst [vmem:[%s308 + $0x38] sm:$0xff] %v693
        %s702 = sand.u32 %s165, 1
        %s703 = scalar_lea.sflag [#allocation5], %s702
        %s704 = sand.u32 %s165, 1
        %s705 = smul.addr %s704, 64
        %s706 = scalar_lea.vmem [#allocation9], %s705
        // Predicated region
        $region57: #{tpu_custom_call.1} parent=39 // pred_check
          %p707 = pneg %p175
        $region58: #{tpu_custom_call.1} parent=39 // pred_check_branch
          %709 = sbr.rel (%p707) target = $region60
        $region59: #{tpu_custom_call.1} parent=39 // pred_region
          %s710 = smul.u32 2, %s27
          %s711 = smul.u32 4, %s28
          %s713 = ssub.s32 1024, 1024
          %714 = vsyncadd %s703, %s713
          %s715 = smul.addr %s710, 4
          %s716 = sadd.s32 %s711, %s715
          %s717 = smul.addr %s716, 128
          %s718 = scalar_lea.hbm %s5, %s717
          %s719 = sshll.u32 %s706, 4
          %s720 = int_to_ptr.vmem [resolvable:$true] %s719
          %725 = dma.vmem_to_hbm [thread:$0]  %s720, 1024, %s718, %s703, 512, 512, 32
        $region60: #{tpu_custom_call.1} parent=39 // pred_fallthru
          _
      $region40: #{tpu_custom_call.1} parent=5 // pred_fallthru
        _
      %p726 = scmp.le.s32.totalorder 2, %s18
      // Predicated region
      $region61: #{tpu_custom_call.1} parent=5 // pred_check
        %p727 = pneg %p726
      $region62: #{tpu_custom_call.1} parent=5 // pred_check_branch
        %729 = sbr.rel (%p727) target = $region64
      $region63: #{tpu_custom_call.1} parent=5 // pred_region
        %s730 = ssub.s32 %s18, 2
        // Predicated region
        $region65: #{tpu_custom_call.1} parent=63 // pred_check
          %p731 = pneg %p181
        $region66: #{tpu_custom_call.1} parent=63 // pred_check_branch
          %733 = sbr.rel (%p731) target = $region68
        $region67: #{tpu_custom_call.1} parent=63 // pred_region
          %s734 = sand.u32 %s166, 1
          %s735 = scalar_lea.sflag [#allocation5], %s734
          %s736 = sand.u32 %s166, 1
          %s737 = smul.addr %s736, 64
          %s738 = scalar_lea.vmem [#allocation9], %s737
          %739 = dma.done %s735, 1024
        $region68: #{tpu_custom_call.1} parent=63 // pred_fallthru
          _
      $region64: #{tpu_custom_call.1} parent=5 // pred_fallthru
        _
    $region6: #{tpu_custom_call.1} parent=1 // loop_footer
      %s22 = sadd.s32 1, %s18
    $region7: #{tpu_custom_call.1} parent=1 // loop_footer_branch
      %17 = sbr.rel target = $region3
    $region8: #{tpu_custom_call.1} parent=1 // loop_exit
      _
    %740 = vsyncpa [#allocation4], 1
    %s741 = scalar_lea.sflag [#allocation4], 1
    %742 = vsyncpa %s741, 1
    %743 = vsyncpa [#allocation7], 1
    %744 = vsyncpa [#allocation5], 1
    %s745 = scalar_lea.sflag [#allocation5], 1
    %746 = vsyncpa %s745, 1

</llo_original>
